<compile_context>
chip_gen: v7x
topology: tpu7x:2x2x1
jax: 0.10.0
libtpu: 0.0.40
codegen_flags: <defaults>
</compile_context>

<pallas_src>
import functools
import math

import jax
import jax.numpy as jnp
from jax import lax
from jax.experimental import pallas as pl
from jax.experimental.pallas import tpu as pltpu


def _ode_traj_kernel(t0_ref, h_ref, n_ref,                     # SMEM scalar prefetch
                     z0_ref, w1_ref, b1_ref, w2_ref, b2_ref,   # VMEM inputs
                     out_ref,                                   # VMEM output (T, B, Hp)
                     z_scr,                                     # VMEM carry (B, Hp)
                     *, T, uniform_steps):
    # Loop-invariant loads / broadcasts, hoisted once for the whole trajectory
    # (JAX does not CSE broadcast_in_dim inside loops).
    w1 = w1_ref[...]
    w2 = w2_ref[...]
    b1b = jnp.broadcast_to(b1_ref[...], z_scr.shape)   # (B, Hp)
    b2b = jnp.broadcast_to(b2_ref[...], z_scr.shape)   # (B, Hp)

    # trajectory[0] = z0
    z_scr[...] = z0_ref[...]
    out_ref[0] = z0_ref[...]

    @pl.loop(1, T)                      # serial carry over intervals, in-kernel
    def _(i):
        t0 = t0_ref[i]
        h = h_ref[i]
        half_h = h * 0.5

        def step(_, carry):
            # midpoint (RK2) step — matches ode_solver() in the PyTorch reference.
            # bias_t = b1 + t is carried and incremented by h each step.
            z, bias_t = carry
            pre1 = jnp.dot(z, w1, preferred_element_type=jnp.float32) + bias_t
            f1 = jnp.dot(jnp.tanh(pre1), w2,
                         preferred_element_type=jnp.float32) + b2b
            z_mid = z + f1 * half_h
            pre2 = jnp.dot(z_mid, w1,
                           preferred_element_type=jnp.float32) + (bias_t + half_h)
            f2 = jnp.dot(jnp.tanh(pre2), w2,
                         preferred_element_type=jnp.float32) + b2b
            return z + f2 * h, bias_t + h

        carry0 = (z_scr[...], b1b + t0)
        if uniform_steps is not None:
            # All intervals share one step count -> static trip count (unrolled when
            # short so the LLO scheduler sees the whole chain).
            z_new, _ = lax.fori_loop(0, uniform_steps, step, carry0,
                                     unroll=uniform_steps <= 8)
        else:
            # Non-uniform spacing -> dynamic trip count from SMEM; no masked steps.
            z_new, _ = lax.fori_loop(0, n_ref[i], step, carry0)

        z_scr[...] = z_new
        out_ref[i] = z_new


@functools.partial(jax.jit, static_argnames=("T", "H", "Hp", "uniform_steps"))
def _ode_forward_impl(z0, w1, b1, w2, b2, t0s, hs, ns, *, T, H, Hp, uniform_steps):
    B = z0.shape[0]
    f32 = jnp.float32
    # Zero-pad the hidden dimension to a lane-dense 128 multiple. Padded lanes of z
    # stay exactly zero (padded rows/cols of W2/b2 are zero), so results are exact.
    zp = jnp.zeros((B, Hp), f32).at[:, :H].set(z0.astype(f32))
    w1p = jnp.zeros((Hp, Hp), f32).at[:H, :H].set(w1.astype(f32))
    b1p = jnp.zeros((1, Hp), f32).at[:, :H].set(b1.astype(f32))
    w2p = jnp.zeros((Hp, Hp), f32).at[:H, :H].set(w2.astype(f32))
    b2p = jnp.zeros((1, Hp), f32).at[:, :H].set(b2.astype(f32))

    kernel = functools.partial(_ode_traj_kernel, T=T, uniform_steps=uniform_steps)

    grid_spec = pltpu.PrefetchScalarGridSpec(
        num_scalar_prefetch=3,
        grid=(1,),                                       # whole trajectory in one step
        in_specs=[
            pl.BlockSpec((B, Hp), lambda i, *_: (0, 0)),     # z0
            pl.BlockSpec((Hp, Hp), lambda i, *_: (0, 0)),    # W1 (DMA'd once)
            pl.BlockSpec((1, Hp), lambda i, *_: (0, 0)),     # b1
            pl.BlockSpec((Hp, Hp), lambda i, *_: (0, 0)),    # W2 (DMA'd once)
            pl.BlockSpec((1, Hp), lambda i, *_: (0, 0)),     # b2
        ],
        out_specs=pl.BlockSpec((T, B, Hp), lambda i, *_: (0, 0, 0)),
        scratch_shapes=[pltpu.VMEM((B, Hp), jnp.float32)],
    )

    # Returns the padded (T, B, Hp) trajectory; caller slices the :H lanes
    # (avoids an extra slice-copy pass inside this jitted body).
    return pl.pallas_call(
        kernel,
        out_shape=jax.ShapeDtypeStruct((T, B, Hp), jnp.float32),
        grid_spec=grid_spec,
        compiler_params=pltpu.CompilerParams(
            dimension_semantics=("arbitrary",)),
    )(t0s, hs, ns, zp, w1p, b1p, w2p, b2p)


def ode_network_forward(z0, t, params):
    """ODENetwork.forward: returns trajectory of shape (len(t), *z0.shape)."""
    w1, b1, w2, b2 = params
    B, H = z0.shape
    Hp = max(128, ((H + 127) // 128) * 128)
    T = len(t)

    # Host-side per-interval integration tables (t is a static Python sequence,
    # exactly like the PyTorch reference where step_num/h are Python scalars).
    # Index 0 is a dummy entry: trajectory row 0 is just z0.
    t0_list, h_list, n_list = [0.0], [0.0], [0]
    for i in range(T - 1):
        a, b = float(t[i]), float(t[i + 1])
        n = max(math.ceil(abs(b - a) / 0.1), 1)
        h = (b - a) / n
        t0_list.append(a)
        h_list.append(h)
        n_list.append(n)

    step_counts = set(n_list[1:])
    uniform_steps = step_counts.pop() if len(step_counts) == 1 else None

    t0s = jnp.asarray(t0_list, jnp.float32)
    hs = jnp.asarray(h_list, jnp.float32)
    ns = jnp.asarray(n_list, jnp.int32)

    out_padded = _ode_forward_impl(z0, w1, b1, w2, b2, t0s, hs, ns,
                                   T=T, H=H, Hp=Hp, uniform_steps=uniform_steps)
    return out_padded[:, :, :H]


def _reference_forward(z0, t, params):
    """Pure-JAX reference (mirrors the PyTorch ode_solver) for a sanity check."""
    w1, b1, w2, b2 = params

    def func(z, tt):
        return jnp.tanh(z @ w1 + b1 + tt) @ w2 + b2

    traj = [z0]
    z = z0
    for i in range(len(t) - 1):
        t0, t1 = float(t[i]), float(t[i + 1])
        step_num = max(math.ceil(abs(t1 - t0) / 0.1), 1)
        h = (t1 - t0) / step_num
        tt = t0
        for _ in range(step_num):
            z_mid = z + func(z, tt) * (h / 2.0)
            z = z + func(z_mid, tt + h / 2.0) * h
            tt = tt + h
        traj.append(z)
    return jnp.stack(traj, axis=0)


if __name__ == "__main__":
    B, H = 8, 32          # small state: batch=8, hidden=32
    T = 4                 # number of time points

    key = jax.random.PRNGKey(0)
    k_z, k_w1, k_b1, k_w2, k_b2 = jax.random.split(key, 5)

    z0 = jax.random.normal(k_z, (B, H), dtype=jnp.float32)
    scale = 1.0 / math.sqrt(H)
    w1 = jax.random.uniform(k_w1, (H, H), jnp.float32, -scale, scale)
    b1 = jax.random.uniform(k_b1, (1, H), jnp.float32, -scale, scale)
    w2 = jax.random.uniform(k_w2, (H, H), jnp.float32, -scale, scale)
    b2 = jax.random.uniform(k_b2, (1, H), jnp.float32, -scale, scale)
    params = (w1, b1, w2, b2)

    t = [0.0, 0.5, 1.0, 1.5]      # len(t) == T, spacing 0.5 -> 5 midpoint steps/interval

    out = ode_network_forward(z0, t, params)
    out = jax.block_until_ready(out)
    assert out.shape == (T, B, H), out.shape

    ref = _reference_forward(z0, t, params)
    assert jnp.allclose(out, ref, atol=1e-4, rtol=1e-4), "mismatch vs reference"

    print("KERNEL_OK")
</pallas_src>

<mosaic_0001>
module attributes {stable_mosaic.version = 11 : i64} {
  func.func @_ode_traj_kernel(%arg0: i32, %arg1: memref<4xf32, #tpu.memory_space<smem>>, %arg2: memref<4xf32, #tpu.memory_space<smem>>, %arg3: memref<4xi32, #tpu.memory_space<smem>>, %arg4: memref<8x128xf32, #tpu.memory_space<vmem>>, %arg5: memref<128x128xf32, #tpu.memory_space<vmem>>, %arg6: memref<1x128xf32, #tpu.memory_space<vmem>>, %arg7: memref<128x128xf32, #tpu.memory_space<vmem>>, %arg8: memref<1x128xf32, #tpu.memory_space<vmem>>, %arg9: memref<4x8x128xf32, #tpu.memory_space<vmem>>, %arg10: memref<8x128xf32, #tpu.memory_space<vmem>>) attributes {dimension_semantics = [#tpu.dimension_semantics<arbitrary>], iteration_bounds = array<i64: 1>, scalar_prefetch = 3 : i64, scratch_operands = 1 : i64, tpu.core_type = #tpu.core_type<tc>, window_params = [{pipeline_mode = #tpu.pipeline_mode<synchronous>, transform_indices = @transform_0, window_bounds = array<i64: 8, 128>}, {pipeline_mode = #tpu.pipeline_mode<synchronous>, transform_indices = @transform_1, window_bounds = array<i64: 128, 128>}, {pipeline_mode = #tpu.pipeline_mode<synchronous>, transform_indices = @transform_2, window_bounds = array<i64: 1, 128>}, {pipeline_mode = #tpu.pipeline_mode<synchronous>, transform_indices = @transform_3, window_bounds = array<i64: 128, 128>}, {pipeline_mode = #tpu.pipeline_mode<synchronous>, transform_indices = @transform_4, window_bounds = array<i64: 1, 128>}, {pipeline_mode = #tpu.pipeline_mode<synchronous>, transform_indices = @transform_5, window_bounds = array<i64: 4, 8, 128>}]} {
    %c0 = arith.constant 0 : index
    %c0_0 = arith.constant 0 : index
    %0 = vector.load %arg5[%c0, %c0_0] : memref<128x128xf32, #tpu.memory_space<vmem>>, vector<128x128xf32>
    %c0_1 = arith.constant 0 : index
    %c0_2 = arith.constant 0 : index
    %1 = vector.load %arg7[%c0_1, %c0_2] : memref<128x128xf32, #tpu.memory_space<vmem>>, vector<128x128xf32>
    %c0_3 = arith.constant 0 : index
    %c0_4 = arith.constant 0 : index
    %2 = vector.load %arg6[%c0_3, %c0_4] : memref<1x128xf32, #tpu.memory_space<vmem>>, vector<1x128xf32>
    %3 = vector.shape_cast %2 : vector<1x128xf32> to vector<1x128xf32>
    %4 = vector.broadcast %3 : vector<1x128xf32> to vector<8x128xf32>
    %c0_5 = arith.constant 0 : index
    %c0_6 = arith.constant 0 : index
    %5 = vector.load %arg8[%c0_5, %c0_6] : memref<1x128xf32, #tpu.memory_space<vmem>>, vector<1x128xf32>
    %6 = vector.shape_cast %5 : vector<1x128xf32> to vector<1x128xf32>
    %7 = vector.broadcast %6 : vector<1x128xf32> to vector<8x128xf32>
    %c0_7 = arith.constant 0 : index
    %c0_8 = arith.constant 0 : index
    %8 = vector.load %arg4[%c0_7, %c0_8] : memref<8x128xf32, #tpu.memory_space<vmem>>, vector<8x128xf32>
    %c0_9 = arith.constant 0 : index
    %c0_10 = arith.constant 0 : index
    %9 = vector.load %arg10[%c0_9, %c0_10] : memref<8x128xf32, #tpu.memory_space<vmem>>, vector<8x128xf32>
    tpu.vector_store %arg10[%c0_9, %c0_10], %8 {strides = array<i32>} : memref<8x128xf32, #tpu.memory_space<vmem>>, vector<8x128xf32>,
    %c0_11 = arith.constant 0 : index
    %c0_12 = arith.constant 0 : index
    %10 = vector.load %arg4[%c0_11, %c0_12] : memref<8x128xf32, #tpu.memory_space<vmem>>, vector<8x128xf32>
    %c0_13 = arith.constant 0 : index
    %c0_14 = arith.constant 0 : index
    %c0_15 = arith.constant 0 : index
    %11 = vector.load %arg9[%c0_13, %c0_14, %c0_15] : memref<4x8x128xf32, #tpu.memory_space<vmem>>, vector<1x8x128xf32>
    %12 = vector.shape_cast %11 : vector<1x8x128xf32> to vector<8x128xf32>
    %13 = vector.shape_cast %10 : vector<8x128xf32> to vector<1x8x128xf32>
    tpu.vector_store %arg9[%c0_13, %c0_14, %c0_15], %13 {strides = array<i32>} : memref<4x8x128xf32, #tpu.memory_space<vmem>>, vector<1x8x128xf32>,
    %c0_i32 = arith.constant 0 : i32
    %c3_i32 = arith.constant 3 : i32
    %14 = arith.addi %c0_i32, %c3_i32 : i32
    %c1_i32 = arith.constant 1 : i32
    scf.for %arg11 = %c0_i32 to %14 step %c1_i32  : i32 {
      %c1_i32_17 = arith.constant 1 : i32
      %15 = arith.muli %arg11, %c1_i32_17 : i32
      %c1_i32_18 = arith.constant 1 : i32
      %16 = arith.addi %c1_i32_18, %15 : i32
      %17 = arith.index_cast %16 : i32 to index
      %18 = memref.load %arg1[%17] : memref<4xf32, #tpu.memory_space<smem>>
      %19 = arith.index_cast %16 : i32 to index
      %20 = memref.load %arg2[%19] : memref<4xf32, #tpu.memory_space<smem>>
      %cst = arith.constant 5.000000e-01 : f32
      %21 = arith.mulf %20, %cst : f32
      %c0_19 = arith.constant 0 : index
      %c0_20 = arith.constant 0 : index
      %22 = vector.load %arg10[%c0_19, %c0_20] : memref<8x128xf32, #tpu.memory_space<vmem>>, vector<8x128xf32>
      %23 = vector.broadcast %18 : f32 to vector<8x128xf32>
      %24 = arith.addf %4, %23 : vector<8x128xf32>
      %c0_i32_21 = arith.constant 0 : i32
      %cst_22 = arith.constant dense<0.000000e+00> : vector<8x128xf32>
      %25 = tpu.matmul %22, %0, %cst_22 {dimension_numbers = #tpu.dot_dimension_numbers<[1], [0], [0], [1], [0, 0, 1, 1], [], []>} : vector<8x128xf32>, vector<128x128xf32>, vector<8x128xf32> -> vector<8x128xf32>
      %26 = arith.addf %25, %24 : vector<8x128xf32>
      %27 = math.tanh %26 : vector<8x128xf32>
      %cst_23 = arith.constant dense<0.000000e+00> : vector<8x128xf32>
      %28 = tpu.matmul %27, %1, %cst_23 {dimension_numbers = #tpu.dot_dimension_numbers<[1], [0], [0], [1], [0, 0, 1, 1], [], []>} : vector<8x128xf32>, vector<128x128xf32>, vector<8x128xf32> -> vector<8x128xf32>
      %29 = arith.addf %28, %7 : vector<8x128xf32>
      %30 = vector.broadcast %21 : f32 to vector<8x128xf32>
      %31 = arith.mulf %29, %30 : vector<8x128xf32>
      %32 = arith.addf %22, %31 : vector<8x128xf32>
      %cst_24 = arith.constant dense<0.000000e+00> : vector<8x128xf32>
      %33 = tpu.matmul %32, %0, %cst_24 {dimension_numbers = #tpu.dot_dimension_numbers<[1], [0], [0], [1], [0, 0, 1, 1], [], []>} : vector<8x128xf32>, vector<128x128xf32>, vector<8x128xf32> -> vector<8x128xf32>
      %34 = vector.broadcast %21 : f32 to vector<8x128xf32>
      %35 = arith.addf %24, %34 : vector<8x128xf32>
      %36 = arith.addf %33, %35 : vector<8x128xf32>
      %37 = math.tanh %36 : vector<8x128xf32>
      %cst_25 = arith.constant dense<0.000000e+00> : vector<8x128xf32>
      %38 = tpu.matmul %37, %1, %cst_25 {dimension_numbers = #tpu.dot_dimension_numbers<[1], [0], [0], [1], [0, 0, 1, 1], [], []>} : vector<8x128xf32>, vector<128x128xf32>, vector<8x128xf32> -> vector<8x128xf32>
      %39 = arith.addf %38, %7 : vector<8x128xf32>
      %40 = vector.broadcast %20 : f32 to vector<8x128xf32>
      %41 = arith.mulf %39, %40 : vector<8x128xf32>
      %42 = arith.addf %22, %41 : vector<8x128xf32>
      %43 = vector.broadcast %20 : f32 to vector<8x128xf32>
      %44 = arith.addf %24, %43 : vector<8x128xf32>
      %c1_i32_26 = arith.constant 1 : i32
      %cst_27 = arith.constant dense<0.000000e+00> : vector<8x128xf32>
      %45 = tpu.matmul %42, %0, %cst_27 {dimension_numbers = #tpu.dot_dimension_numbers<[1], [0], [0], [1], [0, 0, 1, 1], [], []>} : vector<8x128xf32>, vector<128x128xf32>, vector<8x128xf32> -> vector<8x128xf32>
      %46 = arith.addf %45, %44 : vector<8x128xf32>
      %47 = math.tanh %46 : vector<8x128xf32>
      %cst_28 = arith.constant dense<0.000000e+00> : vector<8x128xf32>
      %48 = tpu.matmul %47, %1, %cst_28 {dimension_numbers = #tpu.dot_dimension_numbers<[1], [0], [0], [1], [0, 0, 1, 1], [], []>} : vector<8x128xf32>, vector<128x128xf32>, vector<8x128xf32> -> vector<8x128xf32>
      %49 = arith.addf %48, %7 : vector<8x128xf32>
      %50 = vector.broadcast %21 : f32 to vector<8x128xf32>
      %51 = arith.mulf %49, %50 : vector<8x128xf32>
      %52 = arith.addf %42, %51 : vector<8x128xf32>
      %cst_29 = arith.constant dense<0.000000e+00> : vector<8x128xf32>
      %53 = tpu.matmul %52, %0, %cst_29 {dimension_numbers = #tpu.dot_dimension_numbers<[1], [0], [0], [1], [0, 0, 1, 1], [], []>} : vector<8x128xf32>, vector<128x128xf32>, vector<8x128xf32> -> vector<8x128xf32>
      %54 = vector.broadcast %21 : f32 to vector<8x128xf32>
      %55 = arith.addf %44, %54 : vector<8x128xf32>
      %56 = arith.addf %53, %55 : vector<8x128xf32>
      %57 = math.tanh %56 : vector<8x128xf32>
      %cst_30 = arith.constant dense<0.000000e+00> : vector<8x128xf32>
      %58 = tpu.matmul %57, %1, %cst_30 {dimension_numbers = #tpu.dot_dimension_numbers<[1], [0], [0], [1], [0, 0, 1, 1], [], []>} : vector<8x128xf32>, vector<128x128xf32>, vector<8x128xf32> -> vector<8x128xf32>
      %59 = arith.addf %58, %7 : vector<8x128xf32>
      %60 = vector.broadcast %20 : f32 to vector<8x128xf32>
      %61 = arith.mulf %59, %60 : vector<8x128xf32>
      %62 = arith.addf %42, %61 : vector<8x128xf32>
      %63 = vector.broadcast %20 : f32 to vector<8x128xf32>
      %64 = arith.addf %44, %63 : vector<8x128xf32>
      %c2_i32 = arith.constant 2 : i32
      %cst_31 = arith.constant dense<0.000000e+00> : vector<8x128xf32>
      %65 = tpu.matmul %62, %0, %cst_31 {dimension_numbers = #tpu.dot_dimension_numbers<[1], [0], [0], [1], [0, 0, 1, 1], [], []>} : vector<8x128xf32>, vector<128x128xf32>, vector<8x128xf32> -> vector<8x128xf32>
      %66 = arith.addf %65, %64 : vector<8x128xf32>
      %67 = math.tanh %66 : vector<8x128xf32>
      %cst_32 = arith.constant dense<0.000000e+00> : vector<8x128xf32>
      %68 = tpu.matmul %67, %1, %cst_32 {dimension_numbers = #tpu.dot_dimension_numbers<[1], [0], [0], [1], [0, 0, 1, 1], [], []>} : vector<8x128xf32>, vector<128x128xf32>, vector<8x128xf32> -> vector<8x128xf32>
      %69 = arith.addf %68, %7 : vector<8x128xf32>
      %70 = vector.broadcast %21 : f32 to vector<8x128xf32>
      %71 = arith.mulf %69, %70 : vector<8x128xf32>
      %72 = arith.addf %62, %71 : vector<8x128xf32>
      %cst_33 = arith.constant dense<0.000000e+00> : vector<8x128xf32>
      %73 = tpu.matmul %72, %0, %cst_33 {dimension_numbers = #tpu.dot_dimension_numbers<[1], [0], [0], [1], [0, 0, 1, 1], [], []>} : vector<8x128xf32>, vector<128x128xf32>, vector<8x128xf32> -> vector<8x128xf32>
      %74 = vector.broadcast %21 : f32 to vector<8x128xf32>
      %75 = arith.addf %64, %74 : vector<8x128xf32>
      %76 = arith.addf %73, %75 : vector<8x128xf32>
      %77 = math.tanh %76 : vector<8x128xf32>
      %cst_34 = arith.constant dense<0.000000e+00> : vector<8x128xf32>
      %78 = tpu.matmul %77, %1, %cst_34 {dimension_numbers = #tpu.dot_dimension_numbers<[1], [0], [0], [1], [0, 0, 1, 1], [], []>} : vector<8x128xf32>, vector<128x128xf32>, vector<8x128xf32> -> vector<8x128xf32>
      %79 = arith.addf %78, %7 : vector<8x128xf32>
      %80 = vector.broadcast %20 : f32 to vector<8x128xf32>
      %81 = arith.mulf %79, %80 : vector<8x128xf32>
      %82 = arith.addf %62, %81 : vector<8x128xf32>
      %83 = vector.broadcast %20 : f32 to vector<8x128xf32>
      %84 = arith.addf %64, %83 : vector<8x128xf32>
      %c3_i32_35 = arith.constant 3 : i32
      %cst_36 = arith.constant dense<0.000000e+00> : vector<8x128xf32>
      %85 = tpu.matmul %82, %0, %cst_36 {dimension_numbers = #tpu.dot_dimension_numbers<[1], [0], [0], [1], [0, 0, 1, 1], [], []>} : vector<8x128xf32>, vector<128x128xf32>, vector<8x128xf32> -> vector<8x128xf32>
      %86 = arith.addf %85, %84 : vector<8x128xf32>
      %87 = math.tanh %86 : vector<8x128xf32>
      %cst_37 = arith.constant dense<0.000000e+00> : vector<8x128xf32>
      %88 = tpu.matmul %87, %1, %cst_37 {dimension_numbers = #tpu.dot_dimension_numbers<[1], [0], [0], [1], [0, 0, 1, 1], [], []>} : vector<8x128xf32>, vector<128x128xf32>, vector<8x128xf32> -> vector<8x128xf32>
      %89 = arith.addf %88, %7 : vector<8x128xf32>
      %90 = vector.broadcast %21 : f32 to vector<8x128xf32>
      %91 = arith.mulf %89, %90 : vector<8x128xf32>
      %92 = arith.addf %82, %91 : vector<8x128xf32>
      %cst_38 = arith.constant dense<0.000000e+00> : vector<8x128xf32>
      %93 = tpu.matmul %92, %0, %cst_38 {dimension_numbers = #tpu.dot_dimension_numbers<[1], [0], [0], [1], [0, 0, 1, 1], [], []>} : vector<8x128xf32>, vector<128x128xf32>, vector<8x128xf32> -> vector<8x128xf32>
      %94 = vector.broadcast %21 : f32 to vector<8x128xf32>
      %95 = arith.addf %84, %94 : vector<8x128xf32>
      %96 = arith.addf %93, %95 : vector<8x128xf32>
      %97 = math.tanh %96 : vector<8x128xf32>
      %cst_39 = arith.constant dense<0.000000e+00> : vector<8x128xf32>
      %98 = tpu.matmul %97, %1, %cst_39 {dimension_numbers = #tpu.dot_dimension_numbers<[1], [0], [0], [1], [0, 0, 1, 1], [], []>} : vector<8x128xf32>, vector<128x128xf32>, vector<8x128xf32> -> vector<8x128xf32>
      %99 = arith.addf %98, %7 : vector<8x128xf32>
      %100 = vector.broadcast %20 : f32 to vector<8x128xf32>
      %101 = arith.mulf %99, %100 : vector<8x128xf32>
      %102 = arith.addf %82, %101 : vector<8x128xf32>
      %103 = vector.broadcast %20 : f32 to vector<8x128xf32>
      %104 = arith.addf %84, %103 : vector<8x128xf32>
      %c4_i32 = arith.constant 4 : i32
      %cst_40 = arith.constant dense<0.000000e+00> : vector<8x128xf32>
      %105 = tpu.matmul %102, %0, %cst_40 {dimension_numbers = #tpu.dot_dimension_numbers<[1], [0], [0], [1], [0, 0, 1, 1], [], []>} : vector<8x128xf32>, vector<128x128xf32>, vector<8x128xf32> -> vector<8x128xf32>
      %106 = arith.addf %105, %104 : vector<8x128xf32>
      %107 = math.tanh %106 : vector<8x128xf32>
      %cst_41 = arith.constant dense<0.000000e+00> : vector<8x128xf32>
      %108 = tpu.matmul %107, %1, %cst_41 {dimension_numbers = #tpu.dot_dimension_numbers<[1], [0], [0], [1], [0, 0, 1, 1], [], []>} : vector<8x128xf32>, vector<128x128xf32>, vector<8x128xf32> -> vector<8x128xf32>
      %109 = arith.addf %108, %7 : vector<8x128xf32>
      %110 = vector.broadcast %21 : f32 to vector<8x128xf32>
      %111 = arith.mulf %109, %110 : vector<8x128xf32>
      %112 = arith.addf %102, %111 : vector<8x128xf32>
      %cst_42 = arith.constant dense<0.000000e+00> : vector<8x128xf32>
      %113 = tpu.matmul %112, %0, %cst_42 {dimension_numbers = #tpu.dot_dimension_numbers<[1], [0], [0], [1], [0, 0, 1, 1], [], []>} : vector<8x128xf32>, vector<128x128xf32>, vector<8x128xf32> -> vector<8x128xf32>
      %114 = vector.broadcast %21 : f32 to vector<8x128xf32>
      %115 = arith.addf %104, %114 : vector<8x128xf32>
      %116 = arith.addf %113, %115 : vector<8x128xf32>
      %117 = math.tanh %116 : vector<8x128xf32>
      %cst_43 = arith.constant dense<0.000000e+00> : vector<8x128xf32>
      %118 = tpu.matmul %117, %1, %cst_43 {dimension_numbers = #tpu.dot_dimension_numbers<[1], [0], [0], [1], [0, 0, 1, 1], [], []>} : vector<8x128xf32>, vector<128x128xf32>, vector<8x128xf32> -> vector<8x128xf32>
      %119 = arith.addf %118, %7 : vector<8x128xf32>
      %120 = vector.broadcast %20 : f32 to vector<8x128xf32>
      %121 = arith.mulf %119, %120 : vector<8x128xf32>
      %122 = arith.addf %102, %121 : vector<8x128xf32>
      %123 = vector.broadcast %20 : f32 to vector<8x128xf32>
      %124 = arith.addf %104, %123 : vector<8x128xf32>
      %c0_44 = arith.constant 0 : index
      %c0_45 = arith.constant 0 : index
      %125 = vector.load %arg10[%c0_44, %c0_45] : memref<8x128xf32, #tpu.memory_space<vmem>>, vector<8x128xf32>
      tpu.vector_store %arg10[%c0_44, %c0_45], %122 {strides = array<i32>} : memref<8x128xf32, #tpu.memory_space<vmem>>, vector<8x128xf32>,
      %126 = arith.index_cast %16 : i32 to index
      %c0_46 = arith.constant 0 : index
      %c0_47 = arith.constant 0 : index
      %127 = vector.load %arg9[%126, %c0_46, %c0_47] : memref<4x8x128xf32, #tpu.memory_space<vmem>>, vector<1x8x128xf32>
      %128 = vector.shape_cast %127 : vector<1x8x128xf32> to vector<8x128xf32>
      %129 = vector.shape_cast %122 : vector<8x128xf32> to vector<1x8x128xf32>
      tpu.vector_store %arg9[%126, %c0_46, %c0_47], %129 {strides = array<i32>} : memref<4x8x128xf32, #tpu.memory_space<vmem>>, vector<1x8x128xf32>,
    }
    %c3_i32_16 = arith.constant 3 : i32
    return
  }
  func.func @transform_0(%arg0: i32, %arg1: memref<4xf32, #tpu.memory_space<smem>>, %arg2: memref<4xf32, #tpu.memory_space<smem>>, %arg3: memref<4xi32, #tpu.memory_space<smem>>) -> (i32, i32) {
    %c0_i32 = arith.constant 0 : i32
    %c0_i32_0 = arith.constant 0 : i32
    %c0_i32_1 = arith.constant 0 : i32
    return %c0_i32, %c0_i32_0 : i32, i32
  }
  func.func @transform_1(%arg0: i32, %arg1: memref<4xf32, #tpu.memory_space<smem>>, %arg2: memref<4xf32, #tpu.memory_space<smem>>, %arg3: memref<4xi32, #tpu.memory_space<smem>>) -> (i32, i32) {
    %c0_i32 = arith.constant 0 : i32
    %c0_i32_0 = arith.constant 0 : i32
    %c0_i32_1 = arith.constant 0 : i32
    return %c0_i32, %c0_i32_0 : i32, i32
  }
  func.func @transform_2(%arg0: i32, %arg1: memref<4xf32, #tpu.memory_space<smem>>, %arg2: memref<4xf32, #tpu.memory_space<smem>>, %arg3: memref<4xi32, #tpu.memory_space<smem>>) -> (i32, i32) {
    %c0_i32 = arith.constant 0 : i32
    %c0_i32_0 = arith.constant 0 : i32
    %c0_i32_1 = arith.constant 0 : i32
    return %c0_i32, %c0_i32_0 : i32, i32
  }
  func.func @transform_3(%arg0: i32, %arg1: memref<4xf32, #tpu.memory_space<smem>>, %arg2: memref<4xf32, #tpu.memory_space<smem>>, %arg3: memref<4xi32, #tpu.memory_space<smem>>) -> (i32, i32) {
    %c0_i32 = arith.constant 0 : i32
    %c0_i32_0 = arith.constant 0 : i32
    %c0_i32_1 = arith.constant 0 : i32
    return %c0_i32, %c0_i32_0 : i32, i32
  }
  func.func @transform_4(%arg0: i32, %arg1: memref<4xf32, #tpu.memory_space<smem>>, %arg2: memref<4xf32, #tpu.memory_space<smem>>, %arg3: memref<4xi32, #tpu.memory_space<smem>>) -> (i32, i32) {
    %c0_i32 = arith.constant 0 : i32
    %c0_i32_0 = arith.constant 0 : i32
    %c0_i32_1 = arith.constant 0 : i32
    return %c0_i32, %c0_i32_0 : i32, i32
  }
  func.func @transform_5(%arg0: i32, %arg1: memref<4xf32, #tpu.memory_space<smem>>, %arg2: memref<4xf32, #tpu.memory_space<smem>>, %arg3: memref<4xi32, #tpu.memory_space<smem>>) -> (i32, i32, i32) {
    %c0_i32 = arith.constant 0 : i32
    %c0_i32_0 = arith.constant 0 : i32
    %c0_i32_1 = arith.constant 0 : i32
    %c0_i32_2 = arith.constant 0 : i32
    return %c0_i32, %c0_i32_0, %c0_i32_1 : i32, i32, i32
  }
}

</mosaic_0001>

<llo_original>
// kernel: _ode_forward_impl.1
$region0: #{_ode_forward_impl.1}
  #allocation0 [shape = 'u32[]', space=smem, size = 0x4, offset = 0x4, fixed_abs, tag = 'smem constant byte address 0x4 - core index']
  #allocation1 [shape = 'u32[144,128]{1,0:T(1,128)}', space=vmem, size = 0x12000, scoped, tag = 'internal scratch']
  #allocation2 [shape = 'f32[8,128]{1,0:T(8,128)}', space=vmem, size = 0x1000, scoped, tag = 'scratch operand']
  #allocation3 [shape = 's32[1]{0}', space=sflag, size = 0x4, scoped, tag = 'scoped memory for _ode_forward_impl.1']
  #allocation4 [shape = 'u8[512]{0}', space=smem, size = 0x200, scoped, tag = 'prefetched SMEM operand 0']
  #allocation5 [shape = 'u8[512]{0}', space=smem, size = 0x200, scoped, tag = 'prefetched SMEM operand 1']
  #allocation6 [shape = 'u8[512]{0}', space=smem, size = 0x200, scoped, tag = 'prefetched SMEM operand 2']
  %s0 = inlined_call_operand.vmem [shape: f32[4], index: 0, kind: input, shape index: {}]
  %s1 = inlined_call_operand.vmem [shape: f32[4], index: 1, kind: input, shape index: {}]
  %s2 = inlined_call_operand.vmem [shape: s32[4], index: 2, kind: input, shape index: {}]
  %s3 = inlined_call_operand.vmem [shape: f32[8,128], index: 3, kind: input, shape index: {}]
  %s4 = inlined_call_operand.vmem [shape: f32[128,128], index: 4, kind: input, shape index: {}]
  %s5 = inlined_call_operand.vmem [shape: f32[1,128], index: 5, kind: input, shape index: {}]
  %s6 = inlined_call_operand.vmem [shape: f32[128,128], index: 6, kind: input, shape index: {}]
  %s7 = inlined_call_operand.vmem [shape: f32[1,128], index: 7, kind: input, shape index: {}]
  %s8 = inlined_call_operand.hbm [shape: f32[4,8,128], index: 8, kind: output, shape index: {}]
  %s9 = sld [smem:[#allocation0]]
  $region37: #{_ode_forward_impl.1} parent=0
    _
  %s11 = ssub.s32 1, %s9
  %s12 = scalar_select 0, %s11, %s9
  %s13 = sshll.u32 %s0, 4
  %s14 = int_to_ptr.vmem [resolvable:$true] %s13
  %16 = dma.vmem_to_smem %s14, 16, [#allocation4], [#allocation3]
  %s17 = sshll.u32 %s1, 4
  %s18 = int_to_ptr.vmem [resolvable:$true] %s17
  %20 = dma.vmem_to_smem %s18, 16, [#allocation5], [#allocation3]
  %s21 = sshll.u32 %s2, 4
  %s22 = int_to_ptr.vmem [resolvable:$true] %s21
  %24 = dma.vmem_to_smem %s22, 16, [#allocation6], [#allocation3]
  %25 = dma.done [#allocation3], 48
  %26 = sfence
  $region1: #{_ode_forward_impl.1} parent=0
    #allocation7 [shape = 'u8[16384]{0}', space=vmem, size = 0x4000, scoped, tag = 'output window, operand 0, single buffered']
    #allocation8 [shape = 's32[1]{0}', space=sflag, size = 0x4, scoped, tag = 'scoped memory for _ode_forward_impl.1']
    %27 = vsyncpa [#allocation8], 0
    // Predicated region
    $region2: #{_ode_forward_impl.1} parent=1 // pred_check
      _
    $region3: #{_ode_forward_impl.1} parent=1 // pred_check_branch
      %29 = sbr.rel (0) target = $region5
    $region4: #{_ode_forward_impl.1} parent=1 // pred_region
      _
    $region5: #{_ode_forward_impl.1} parent=1 // pred_fallthru
      _
    // Predicated region
    $region6: #{_ode_forward_impl.1} parent=1 // pred_check
      _
    $region7: #{_ode_forward_impl.1} parent=1 // pred_check_branch
      %31 = sbr.rel (0) target = $region9
    $region8: #{_ode_forward_impl.1} parent=1 // pred_region
      _
    $region9: #{_ode_forward_impl.1} parent=1 // pred_fallthru
      _
    // Predicated region
    $region10: #{_ode_forward_impl.1} parent=1 // pred_check
      _
    $region11: #{_ode_forward_impl.1} parent=1 // pred_check_branch
      %33 = sbr.rel (0) target = $region13
    $region12: #{_ode_forward_impl.1} parent=1 // pred_region
      _
    $region13: #{_ode_forward_impl.1} parent=1 // pred_fallthru
      _
    // Predicated region
    $region14: #{_ode_forward_impl.1} parent=1 // pred_check
      _
    $region15: #{_ode_forward_impl.1} parent=1 // pred_check_branch
      %35 = sbr.rel (0) target = $region17
    $region16: #{_ode_forward_impl.1} parent=1 // pred_region
      _
    $region17: #{_ode_forward_impl.1} parent=1 // pred_fallthru
      _
    // Predicated region
    $region18: #{_ode_forward_impl.1} parent=1 // pred_check
      _
    $region19: #{_ode_forward_impl.1} parent=1 // pred_check_branch
      %37 = sbr.rel (0) target = $region21
    $region20: #{_ode_forward_impl.1} parent=1 // pred_region
      _
    $region21: #{_ode_forward_impl.1} parent=1 // pred_fallthru
      _
    %v38 = vld [vmem:[%s4] sm:$0xff]
    %v39 = vld [vmem:[%s4 + $0x8] sm:$0xff]
    %v40 = vld [vmem:[%s4 + $0x10] sm:$0xff]
    %v41 = vld [vmem:[%s4 + $0x18] sm:$0xff]
    %v42 = vld [vmem:[%s4 + $0x20] sm:$0xff]
    %v43 = vld [vmem:[%s4 + $0x28] sm:$0xff]
    %v44 = vld [vmem:[%s4 + $0x30] sm:$0xff]
    %v45 = vld [vmem:[%s4 + $0x38] sm:$0xff]
    %v46 = vld [vmem:[%s4 + $0x40] sm:$0xff]
    %v47 = vld [vmem:[%s4 + $0x48] sm:$0xff]
    %v48 = vld [vmem:[%s4 + $0x50] sm:$0xff]
    %v49 = vld [vmem:[%s4 + $0x58] sm:$0xff]
    %v50 = vld [vmem:[%s4 + $0x60] sm:$0xff]
    %v51 = vld [vmem:[%s4 + $0x68] sm:$0xff]
    %v52 = vld [vmem:[%s4 + $0x70] sm:$0xff]
    %v53 = vld [vmem:[%s4 + $0x78] sm:$0xff]
    %v54 = vld [vmem:[%s6] sm:$0xff]
    %v55 = vld [vmem:[%s6 + $0x8] sm:$0xff]
    %v56 = vld [vmem:[%s6 + $0x10] sm:$0xff]
    %v57 = vld [vmem:[%s6 + $0x18] sm:$0xff]
    %v58 = vld [vmem:[%s6 + $0x20] sm:$0xff]
    %v59 = vld [vmem:[%s6 + $0x28] sm:$0xff]
    %v60 = vld [vmem:[%s6 + $0x30] sm:$0xff]
    %v61 = vld [vmem:[%s6 + $0x38] sm:$0xff]
    %v62 = vld [vmem:[%s6 + $0x40] sm:$0xff]
    %v63 = vld [vmem:[%s6 + $0x48] sm:$0xff]
    %v64 = vld [vmem:[%s6 + $0x50] sm:$0xff]
    %v65 = vld [vmem:[%s6 + $0x58] sm:$0xff]
    %v66 = vld [vmem:[%s6 + $0x60] sm:$0xff]
    %v67 = vld [vmem:[%s6 + $0x68] sm:$0xff]
    %v68 = vld [vmem:[%s6 + $0x70] sm:$0xff]
    %v69 = vld [vmem:[%s6 + $0x78] sm:$0xff]
    %v70 = vld [vmem:[%s5] sm:$0x1]
    %v72 = vlaneseq
    %v73 = vshrl.u32 %v72, 7
    %v74 = vsub.s32 0, %v73
    %v75 = vrot.slane %v70, %v74
    %v77 = vld [vmem:[%s7] sm:$0x1]
    %v79 = vlaneseq
    %v80 = vshrl.u32 %v79, 7
    %v81 = vsub.s32 0, %v80
    %v82 = vrot.slane %v77, %v81
    %v84 = vld [vmem:[%s3] sm:$0xff]
    %85 = vst [vmem:[#allocation2] sm:$0xff] %v84
    %v86 = vld [vmem:[%s3] sm:$0xff]
    %87 = vst [vmem:[#allocation7] sm:$0xff] %v86
    loop: start=0, step=1, limit=3
    $region22: #{_ode_forward_impl.1} parent=1 // loop_pre_header
      _
    $region23: #{_ode_forward_impl.1} parent=1 // loop_header
      %s89 = sphi 0, %s93
      %p90 = scmp.ge.s32.totalorder %s89, 3
    $region24: #{_ode_forward_impl.1} parent=1 // loop_header_branch
      %92 = sbr.rel (%p90) target = $region28
    $region25: #{_ode_forward_impl.1} parent=1 // loop_body
      %s94 = sadd.s32 %s89, 1
      %s95 = sld [smem:[#allocation4 + %s94]]
      %s96 = sld [smem:[#allocation5 + %s94]]
      %s97 = smul.f32 %s96, 0.5
      %v98 = vld [vmem:[#allocation2] sm:$0xff]
      %v99 = vstv %s95
      %v100 = vadd.f32 %v75, %v99
      %101 = vmatprep.subr.mxu0 0.0
      %102 = vmatpush1.msra.mxu0 %v38
      %103 = vmatprep.subr.mxu0 0.0
      %104 = vmatpush1.msra.mxu0 %v39
      %105 = vmatprep.subr.mxu0 0.0
      %106 = vmatpush1.msra.mxu0 %v40
      %107 = vmatprep.subr.mxu0 0.0
      %108 = vmatpush1.msra.mxu0 %v41
      %109 = vmatprep.subr.mxu0 0.0
      %110 = vmatpush1.msra.mxu0 %v42
      %111 = vmatprep.subr.mxu0 0.0
      %112 = vmatpush1.msra.mxu0 %v43
      %113 = vmatprep.subr.mxu0 0.0
      %114 = vmatpush1.msra.mxu0 %v44
      %115 = vmatprep.subr.mxu0 0.0
      %116 = vmatpush1.msra.mxu0 %v45
      %117 = vmatprep.subr.mxu0 0.0
      %118 = vmatpush1.msra.mxu0 %v46
      %119 = vmatprep.subr.mxu0 0.0
      %120 = vmatpush1.msra.mxu0 %v47
      %121 = vmatprep.subr.mxu0 0.0
      %122 = vmatpush1.msra.mxu0 %v48
      %123 = vmatprep.subr.mxu0 0.0
      %124 = vmatpush1.msra.mxu0 %v49
      %125 = vmatprep.subr.mxu0 0.0
      %126 = vmatpush1.msra.mxu0 %v50
      %127 = vmatprep.subr.mxu0 0.0
      %128 = vmatpush1.msra.mxu0 %v51
      %129 = vmatprep.subr.mxu0 0.0
      %130 = vmatpush1.msra.mxu0 %v52
      %131 = vmatprep.subr.mxu0 0.0
      %132 = vmatpush1.msra.mxu0 %v53
      %133 = vmatprep.subr.mxu0 0.0
      %134 = vmatpush1.msra.mxu0 0.0
      %135 = vmatprep.subr.mxu0 0.0
      %136 = vmatpush1.msra.mxu0 0.0
      %137 = vmatprep.subr.mxu0 0.0
      %138 = vmatpush1.msra.mxu0 0.0
      %139 = vmatprep.subr.mxu0 0.0
      %140 = vmatpush1.msra.mxu0 0.0
      %141 = vmatprep.subr.mxu0 0.0
      %142 = vmatpush1.msra.mxu0 0.0
      %143 = vmatprep.subr.mxu0 0.0
      %144 = vmatpush1.msra.mxu0 0.0
      %145 = vmatprep.subr.mxu0 0.0
      %146 = vmatpush1.msra.mxu0 0.0
      %147 = vmatprep.subr.mxu0 0.0
      %148 = vmatpush1.msra.mxu0 0.0
      %149 = vmatprep.subr.mxu0 0.0
      %150 = vmatpush1.msra.mxu0 0.0
      %151 = vmatprep.subr.mxu0 0.0
      %152 = vmatpush1.msra.mxu0 0.0
      %153 = vmatprep.subr.mxu0 0.0
      %154 = vmatpush1.msra.mxu0 0.0
      %155 = vmatprep.subr.mxu0 0.0
      %156 = vmatpush1.msra.mxu0 0.0
      %157 = vmatprep.subr.mxu0 0.0
      %158 = vmatpush1.msra.mxu0 0.0
      %159 = vmatprep.subr.mxu0 0.0
      %160 = vmatpush1.msra.mxu0 0.0
      %161 = vmatprep.subr.mxu0 0.0
      %162 = vmatpush1.msra.mxu0 0.0
      %163 = vmatprep.subr.mxu0 0.0
      %164 = vmatpush1.msra.mxu0 0.0
      %165 = vmatprep.mubr.f32.mxu0 0.0
      %166 = vmatmul.mubr.f32.gmra.mrb[0].mxu0 %v98
      %v167 = vpop.f32.mrb[0].mxu0
      %v168 = vadd.f32 %v100, %v167
      %v169 = vpop.f32.mrb[0].mxu0
      %170 = vdwg.mxu0
      %v171 = vtanh.pop %v168
      %172 = vmatprep.subr.mxu0 0.0
      %173 = vmatpush1.msra.mxu0 %v54
      %174 = vmatprep.subr.mxu0 0.0
      %175 = vmatpush1.msra.mxu0 %v55
      %176 = vmatprep.subr.mxu0 0.0
      %177 = vmatpush1.msra.mxu0 %v56
      %178 = vmatprep.subr.mxu0 0.0
      %179 = vmatpush1.msra.mxu0 %v57
      %180 = vmatprep.subr.mxu0 0.0
      %181 = vmatpush1.msra.mxu0 %v58
      %182 = vmatprep.subr.mxu0 0.0
      %183 = vmatpush1.msra.mxu0 %v59
      %184 = vmatprep.subr.mxu0 0.0
      %185 = vmatpush1.msra.mxu0 %v60
      %186 = vmatprep.subr.mxu0 0.0
      %187 = vmatpush1.msra.mxu0 %v61
      %188 = vmatprep.subr.mxu0 0.0
      %189 = vmatpush1.msra.mxu0 %v62
      %190 = vmatprep.subr.mxu0 0.0
      %191 = vmatpush1.msra.mxu0 %v63
      %192 = vmatprep.subr.mxu0 0.0
      %193 = vmatpush1.msra.mxu0 %v64
      %194 = vmatprep.subr.mxu0 0.0
      %195 = vmatpush1.msra.mxu0 %v65
      %196 = vmatprep.subr.mxu0 0.0
      %197 = vmatpush1.msra.mxu0 %v66
      %198 = vmatprep.subr.mxu0 0.0
      %199 = vmatpush1.msra.mxu0 %v67
      %200 = vmatprep.subr.mxu0 0.0
      %201 = vmatpush1.msra.mxu0 %v68
      %202 = vmatprep.subr.mxu0 0.0
      %203 = vmatpush1.msra.mxu0 %v69
      %204 = vmatprep.subr.mxu0 0.0
      %205 = vmatpush1.msra.mxu0 0.0
      %206 = vmatprep.subr.mxu0 0.0
      %207 = vmatpush1.msra.mxu0 0.0
      %208 = vmatprep.subr.mxu0 0.0
      %209 = vmatpush1.msra.mxu0 0.0
      %210 = vmatprep.subr.mxu0 0.0
      %211 = vmatpush1.msra.mxu0 0.0
      %212 = vmatprep.subr.mxu0 0.0
      %213 = vmatpush1.msra.mxu0 0.0
      %214 = vmatprep.subr.mxu0 0.0
      %215 = vmatpush1.msra.mxu0 0.0
      %216 = vmatprep.subr.mxu0 0.0
      %217 = vmatpush1.msra.mxu0 0.0
      %218 = vmatprep.subr.mxu0 0.0
      %219 = vmatpush1.msra.mxu0 0.0
      %220 = vmatprep.subr.mxu0 0.0
      %221 = vmatpush1.msra.mxu0 0.0
      %222 = vmatprep.subr.mxu0 0.0
      %223 = vmatpush1.msra.mxu0 0.0
      %224 = vmatprep.subr.mxu0 0.0
      %225 = vmatpush1.msra.mxu0 0.0
      %226 = vmatprep.subr.mxu0 0.0
      %227 = vmatpush1.msra.mxu0 0.0
      %228 = vmatprep.subr.mxu0 0.0
      %229 = vmatpush1.msra.mxu0 0.0
      %230 = vmatprep.subr.mxu0 0.0
      %231 = vmatpush1.msra.mxu0 0.0
      %232 = vmatprep.subr.mxu0 0.0
      %233 = vmatpush1.msra.mxu0 0.0
      %234 = vmatprep.subr.mxu0 0.0
      %235 = vmatpush1.msra.mxu0 0.0
      %236 = vmatprep.mubr.f32.mxu0 0.0
      %237 = vmatmul.mubr.f32.gmra.mrb[0].mxu0 %v171
      %v238 = vpop.f32.mrb[0].mxu0
      %v239 = vadd.f32 %v82, %v238
      %v240 = vpop.f32.mrb[0].mxu0
      %241 = vdwg.mxu0
      %v242 = vstv %s97
      %v243 = vmul.f32 %v239, %v242
      %v244 = vadd.f32 %v98, %v243
      %v245 = vadd.f32 %v100, %v242
      %246 = vmatprep.subr.mxu0 0.0
      %247 = vmatpush1.msra.mxu0 %v38
      %248 = vmatprep.subr.mxu0 0.0
      %249 = vmatpush1.msra.mxu0 %v39
      %250 = vmatprep.subr.mxu0 0.0
      %251 = vmatpush1.msra.mxu0 %v40
      %252 = vmatprep.subr.mxu0 0.0
      %253 = vmatpush1.msra.mxu0 %v41
      %254 = vmatprep.subr.mxu0 0.0
      %255 = vmatpush1.msra.mxu0 %v42
      %256 = vmatprep.subr.mxu0 0.0
      %257 = vmatpush1.msra.mxu0 %v43
      %258 = vmatprep.subr.mxu0 0.0
      %259 = vmatpush1.msra.mxu0 %v44
      %260 = vmatprep.subr.mxu0 0.0
      %261 = vmatpush1.msra.mxu0 %v45
      %262 = vmatprep.subr.mxu0 0.0
      %263 = vmatpush1.msra.mxu0 %v46
      %264 = vmatprep.subr.mxu0 0.0
      %265 = vmatpush1.msra.mxu0 %v47
      %266 = vmatprep.subr.mxu0 0.0
      %267 = vmatpush1.msra.mxu0 %v48
      %268 = vmatprep.subr.mxu0 0.0
      %269 = vmatpush1.msra.mxu0 %v49
      %270 = vmatprep.subr.mxu0 0.0
      %271 = vmatpush1.msra.mxu0 %v50
      %272 = vmatprep.subr.mxu0 0.0
      %273 = vmatpush1.msra.mxu0 %v51
      %274 = vmatprep.subr.mxu0 0.0
      %275 = vmatpush1.msra.mxu0 %v52
      %276 = vmatprep.subr.mxu0 0.0
      %277 = vmatpush1.msra.mxu0 %v53
      %278 = vmatprep.subr.mxu0 0.0
      %279 = vmatpush1.msra.mxu0 0.0
      %280 = vmatprep.subr.mxu0 0.0
      %281 = vmatpush1.msra.mxu0 0.0
      %282 = vmatprep.subr.mxu0 0.0
      %283 = vmatpush1.msra.mxu0 0.0
      %284 = vmatprep.subr.mxu0 0.0
      %285 = vmatpush1.msra.mxu0 0.0
      %286 = vmatprep.subr.mxu0 0.0
      %287 = vmatpush1.msra.mxu0 0.0
      %288 = vmatprep.subr.mxu0 0.0
      %289 = vmatpush1.msra.mxu0 0.0
      %290 = vmatprep.subr.mxu0 0.0
      %291 = vmatpush1.msra.mxu0 0.0
      %292 = vmatprep.subr.mxu0 0.0
      %293 = vmatpush1.msra.mxu0 0.0
      %294 = vmatprep.subr.mxu0 0.0
      %295 = vmatpush1.msra.mxu0 0.0
      %296 = vmatprep.subr.mxu0 0.0
      %297 = vmatpush1.msra.mxu0 0.0
      %298 = vmatprep.subr.mxu0 0.0
      %299 = vmatpush1.msra.mxu0 0.0
      %300 = vmatprep.subr.mxu0 0.0
      %301 = vmatpush1.msra.mxu0 0.0
      %302 = vmatprep.subr.mxu0 0.0
      %303 = vmatpush1.msra.mxu0 0.0
      %304 = vmatprep.subr.mxu0 0.0
      %305 = vmatpush1.msra.mxu0 0.0
      %306 = vmatprep.subr.mxu0 0.0
      %307 = vmatpush1.msra.mxu0 0.0
      %308 = vmatprep.subr.mxu0 0.0
      %309 = vmatpush1.msra.mxu0 0.0
      %310 = vmatprep.mubr.f32.mxu0 0.0
      %311 = vmatmul.mubr.f32.gmra.mrb[0].mxu0 %v244
      %v312 = vpop.f32.mrb[0].mxu0
      %v313 = vadd.f32 %v245, %v312
      %v314 = vpop.f32.mrb[0].mxu0
      %315 = vdwg.mxu0
      %v316 = vtanh.pop %v313
      %317 = vmatprep.subr.mxu0 0.0
      %318 = vmatpush1.msra.mxu0 %v54
      %319 = vmatprep.subr.mxu0 0.0
      %320 = vmatpush1.msra.mxu0 %v55
      %321 = vmatprep.subr.mxu0 0.0
      %322 = vmatpush1.msra.mxu0 %v56
      %323 = vmatprep.subr.mxu0 0.0
      %324 = vmatpush1.msra.mxu0 %v57
      %325 = vmatprep.subr.mxu0 0.0
      %326 = vmatpush1.msra.mxu0 %v58
      %327 = vmatprep.subr.mxu0 0.0
      %328 = vmatpush1.msra.mxu0 %v59
      %329 = vmatprep.subr.mxu0 0.0
      %330 = vmatpush1.msra.mxu0 %v60
      %331 = vmatprep.subr.mxu0 0.0
      %332 = vmatpush1.msra.mxu0 %v61
      %333 = vmatprep.subr.mxu0 0.0
      %334 = vmatpush1.msra.mxu0 %v62
      %335 = vmatprep.subr.mxu0 0.0
      %336 = vmatpush1.msra.mxu0 %v63
      %337 = vmatprep.subr.mxu0 0.0
      %338 = vmatpush1.msra.mxu0 %v64
      %339 = vmatprep.subr.mxu0 0.0
      %340 = vmatpush1.msra.mxu0 %v65
      %341 = vmatprep.subr.mxu0 0.0
      %342 = vmatpush1.msra.mxu0 %v66
      %343 = vmatprep.subr.mxu0 0.0
      %344 = vmatpush1.msra.mxu0 %v67
      %345 = vmatprep.subr.mxu0 0.0
      %346 = vmatpush1.msra.mxu0 %v68
      %347 = vmatprep.subr.mxu0 0.0
      %348 = vmatpush1.msra.mxu0 %v69
      %349 = vmatprep.subr.mxu0 0.0
      %350 = vmatpush1.msra.mxu0 0.0
      %351 = vmatprep.subr.mxu0 0.0
      %352 = vmatpush1.msra.mxu0 0.0
      %353 = vmatprep.subr.mxu0 0.0
      %354 = vmatpush1.msra.mxu0 0.0
      %355 = vmatprep.subr.mxu0 0.0
      %356 = vmatpush1.msra.mxu0 0.0
      %357 = vmatprep.subr.mxu0 0.0
      %358 = vmatpush1.msra.mxu0 0.0
      %359 = vmatprep.subr.mxu0 0.0
      %360 = vmatpush1.msra.mxu0 0.0
      %361 = vmatprep.subr.mxu0 0.0
      %362 = vmatpush1.msra.mxu0 0.0
      %363 = vmatprep.subr.mxu0 0.0
      %364 = vmatpush1.msra.mxu0 0.0
      %365 = vmatprep.subr.mxu0 0.0
      %366 = vmatpush1.msra.mxu0 0.0
      %367 = vmatprep.subr.mxu0 0.0
      %368 = vmatpush1.msra.mxu0 0.0
      %369 = vmatprep.subr.mxu0 0.0
      %370 = vmatpush1.msra.mxu0 0.0
      %371 = vmatprep.subr.mxu0 0.0
      %372 = vmatpush1.msra.mxu0 0.0
      %373 = vmatprep.subr.mxu0 0.0
      %374 = vmatpush1.msra.mxu0 0.0
      %375 = vmatprep.subr.mxu0 0.0
      %376 = vmatpush1.msra.mxu0 0.0
      %377 = vmatprep.subr.mxu0 0.0
      %378 = vmatpush1.msra.mxu0 0.0
      %379 = vmatprep.subr.mxu0 0.0
      %380 = vmatpush1.msra.mxu0 0.0
      %381 = vmatprep.mubr.f32.mxu0 0.0
      %382 = vmatmul.mubr.f32.gmra.mrb[0].mxu0 %v316
      %v383 = vpop.f32.mrb[0].mxu0
      %v384 = vadd.f32 %v82, %v383
      %v385 = vpop.f32.mrb[0].mxu0
      %386 = vdwg.mxu0
      %v387 = vstv %s96
      %v388 = vmul.f32 %v384, %v387
      %v389 = vadd.f32 %v98, %v388
      %v390 = vadd.f32 %v100, %v387
      %391 = vmatprep.subr.mxu0 0.0
      %392 = vmatpush1.msra.mxu0 %v38
      %393 = vmatprep.subr.mxu0 0.0
      %394 = vmatpush1.msra.mxu0 %v39
      %395 = vmatprep.subr.mxu0 0.0
      %396 = vmatpush1.msra.mxu0 %v40
      %397 = vmatprep.subr.mxu0 0.0
      %398 = vmatpush1.msra.mxu0 %v41
      %399 = vmatprep.subr.mxu0 0.0
      %400 = vmatpush1.msra.mxu0 %v42
      %401 = vmatprep.subr.mxu0 0.0
      %402 = vmatpush1.msra.mxu0 %v43
      %403 = vmatprep.subr.mxu0 0.0
      %404 = vmatpush1.msra.mxu0 %v44
      %405 = vmatprep.subr.mxu0 0.0
      %406 = vmatpush1.msra.mxu0 %v45
      %407 = vmatprep.subr.mxu0 0.0
      %408 = vmatpush1.msra.mxu0 %v46
      %409 = vmatprep.subr.mxu0 0.0
      %410 = vmatpush1.msra.mxu0 %v47
      %411 = vmatprep.subr.mxu0 0.0
      %412 = vmatpush1.msra.mxu0 %v48
      %413 = vmatprep.subr.mxu0 0.0
      %414 = vmatpush1.msra.mxu0 %v49
      %415 = vmatprep.subr.mxu0 0.0
      %416 = vmatpush1.msra.mxu0 %v50
      %417 = vmatprep.subr.mxu0 0.0
      %418 = vmatpush1.msra.mxu0 %v51
      %419 = vmatprep.subr.mxu0 0.0
      %420 = vmatpush1.msra.mxu0 %v52
      %421 = vmatprep.subr.mxu0 0.0
      %422 = vmatpush1.msra.mxu0 %v53
      %423 = vmatprep.subr.mxu0 0.0
      %424 = vmatpush1.msra.mxu0 0.0
      %425 = vmatprep.subr.mxu0 0.0
      %426 = vmatpush1.msra.mxu0 0.0
      %427 = vmatprep.subr.mxu0 0.0
      %428 = vmatpush1.msra.mxu0 0.0
      %429 = vmatprep.subr.mxu0 0.0
      %430 = vmatpush1.msra.mxu0 0.0
      %431 = vmatprep.subr.mxu0 0.0
      %432 = vmatpush1.msra.mxu0 0.0
      %433 = vmatprep.subr.mxu0 0.0
      %434 = vmatpush1.msra.mxu0 0.0
      %435 = vmatprep.subr.mxu0 0.0
      %436 = vmatpush1.msra.mxu0 0.0
      %437 = vmatprep.subr.mxu0 0.0
      %438 = vmatpush1.msra.mxu0 0.0
      %439 = vmatprep.subr.mxu0 0.0
      %440 = vmatpush1.msra.mxu0 0.0
      %441 = vmatprep.subr.mxu0 0.0
      %442 = vmatpush1.msra.mxu0 0.0
      %443 = vmatprep.subr.mxu0 0.0
      %444 = vmatpush1.msra.mxu0 0.0
      %445 = vmatprep.subr.mxu0 0.0
      %446 = vmatpush1.msra.mxu0 0.0
      %447 = vmatprep.subr.mxu0 0.0
      %448 = vmatpush1.msra.mxu0 0.0
      %449 = vmatprep.subr.mxu0 0.0
      %450 = vmatpush1.msra.mxu0 0.0
      %451 = vmatprep.subr.mxu0 0.0
      %452 = vmatpush1.msra.mxu0 0.0
      %453 = vmatprep.subr.mxu0 0.0
      %454 = vmatpush1.msra.mxu0 0.0
      %455 = vmatprep.mubr.f32.mxu0 0.0
      %456 = vmatmul.mubr.f32.gmra.mrb[0].mxu0 %v389
      %v457 = vpop.f32.mrb[0].mxu0
      %v458 = vadd.f32 %v390, %v457
      %v459 = vpop.f32.mrb[0].mxu0
      %460 = vdwg.mxu0
      %v461 = vtanh.pop %v458
      %462 = vmatprep.subr.mxu0 0.0
      %463 = vmatpush1.msra.mxu0 %v54
      %464 = vmatprep.subr.mxu0 0.0
      %465 = vmatpush1.msra.mxu0 %v55
      %466 = vmatprep.subr.mxu0 0.0
      %467 = vmatpush1.msra.mxu0 %v56
      %468 = vmatprep.subr.mxu0 0.0
      %469 = vmatpush1.msra.mxu0 %v57
      %470 = vmatprep.subr.mxu0 0.0
      %471 = vmatpush1.msra.mxu0 %v58
      %472 = vmatprep.subr.mxu0 0.0
      %473 = vmatpush1.msra.mxu0 %v59
      %474 = vmatprep.subr.mxu0 0.0
      %475 = vmatpush1.msra.mxu0 %v60
      %476 = vmatprep.subr.mxu0 0.0
      %477 = vmatpush1.msra.mxu0 %v61
      %478 = vmatprep.subr.mxu0 0.0
      %479 = vmatpush1.msra.mxu0 %v62
      %480 = vmatprep.subr.mxu0 0.0
      %481 = vmatpush1.msra.mxu0 %v63
      %482 = vmatprep.subr.mxu0 0.0
      %483 = vmatpush1.msra.mxu0 %v64
      %484 = vmatprep.subr.mxu0 0.0
      %485 = vmatpush1.msra.mxu0 %v65
      %486 = vmatprep.subr.mxu0 0.0
      %487 = vmatpush1.msra.mxu0 %v66
      %488 = vmatprep.subr.mxu0 0.0
      %489 = vmatpush1.msra.mxu0 %v67
      %490 = vmatprep.subr.mxu0 0.0
      %491 = vmatpush1.msra.mxu0 %v68
      %492 = vmatprep.subr.mxu0 0.0
      %493 = vmatpush1.msra.mxu0 %v69
      %494 = vmatprep.subr.mxu0 0.0
      %495 = vmatpush1.msra.mxu0 0.0
      %496 = vmatprep.subr.mxu0 0.0
      %497 = vmatpush1.msra.mxu0 0.0
      %498 = vmatprep.subr.mxu0 0.0
      %499 = vmatpush1.msra.mxu0 0.0
      %500 = vmatprep.subr.mxu0 0.0
      %501 = vmatpush1.msra.mxu0 0.0
      %502 = vmatprep.subr.mxu0 0.0
      %503 = vmatpush1.msra.mxu0 0.0
      %504 = vmatprep.subr.mxu0 0.0
      %505 = vmatpush1.msra.mxu0 0.0
      %506 = vmatprep.subr.mxu0 0.0
      %507 = vmatpush1.msra.mxu0 0.0
      %508 = vmatprep.subr.mxu0 0.0
      %509 = vmatpush1.msra.mxu0 0.0
      %510 = vmatprep.subr.mxu0 0.0
      %511 = vmatpush1.msra.mxu0 0.0
      %512 = vmatprep.subr.mxu0 0.0
      %513 = vmatpush1.msra.mxu0 0.0
      %514 = vmatprep.subr.mxu0 0.0
      %515 = vmatpush1.msra.mxu0 0.0
      %516 = vmatprep.subr.mxu0 0.0
      %517 = vmatpush1.msra.mxu0 0.0
      %518 = vmatprep.subr.mxu0 0.0
      %519 = vmatpush1.msra.mxu0 0.0
      %520 = vmatprep.subr.mxu0 0.0
      %521 = vmatpush1.msra.mxu0 0.0
      %522 = vmatprep.subr.mxu0 0.0
      %523 = vmatpush1.msra.mxu0 0.0
      %524 = vmatprep.subr.mxu0 0.0
      %525 = vmatpush1.msra.mxu0 0.0
      %526 = vmatprep.mubr.f32.mxu0 0.0
      %527 = vmatmul.mubr.f32.gmra.mrb[0].mxu0 %v461
      %v528 = vpop.f32.mrb[0].mxu0
      %v529 = vadd.f32 %v82, %v528
      %v530 = vpop.f32.mrb[0].mxu0
      %531 = vdwg.mxu0
      %v532 = vmul.f32 %v529, %v242
      %v533 = vadd.f32 %v389, %v532
      %v534 = vadd.f32 %v390, %v242
      %535 = vmatprep.subr.mxu0 0.0
      %536 = vmatpush1.msra.mxu0 %v38
      %537 = vmatprep.subr.mxu0 0.0
      %538 = vmatpush1.msra.mxu0 %v39
      %539 = vmatprep.subr.mxu0 0.0
      %540 = vmatpush1.msra.mxu0 %v40
      %541 = vmatprep.subr.mxu0 0.0
      %542 = vmatpush1.msra.mxu0 %v41
      %543 = vmatprep.subr.mxu0 0.0
      %544 = vmatpush1.msra.mxu0 %v42
      %545 = vmatprep.subr.mxu0 0.0
      %546 = vmatpush1.msra.mxu0 %v43
      %547 = vmatprep.subr.mxu0 0.0
      %548 = vmatpush1.msra.mxu0 %v44
      %549 = vmatprep.subr.mxu0 0.0
      %550 = vmatpush1.msra.mxu0 %v45
      %551 = vmatprep.subr.mxu0 0.0
      %552 = vmatpush1.msra.mxu0 %v46
      %553 = vmatprep.subr.mxu0 0.0
      %554 = vmatpush1.msra.mxu0 %v47
      %555 = vmatprep.subr.mxu0 0.0
      %556 = vmatpush1.msra.mxu0 %v48
      %557 = vmatprep.subr.mxu0 0.0
      %558 = vmatpush1.msra.mxu0 %v49
      %559 = vmatprep.subr.mxu0 0.0
      %560 = vmatpush1.msra.mxu0 %v50
      %561 = vmatprep.subr.mxu0 0.0
      %562 = vmatpush1.msra.mxu0 %v51
      %563 = vmatprep.subr.mxu0 0.0
      %564 = vmatpush1.msra.mxu0 %v52
      %565 = vmatprep.subr.mxu0 0.0
      %566 = vmatpush1.msra.mxu0 %v53
      %567 = vmatprep.subr.mxu0 0.0
      %568 = vmatpush1.msra.mxu0 0.0
      %569 = vmatprep.subr.mxu0 0.0
      %570 = vmatpush1.msra.mxu0 0.0
      %571 = vmatprep.subr.mxu0 0.0
      %572 = vmatpush1.msra.mxu0 0.0
      %573 = vmatprep.subr.mxu0 0.0
      %574 = vmatpush1.msra.mxu0 0.0
      %575 = vmatprep.subr.mxu0 0.0
      %576 = vmatpush1.msra.mxu0 0.0
      %577 = vmatprep.subr.mxu0 0.0
      %578 = vmatpush1.msra.mxu0 0.0
      %579 = vmatprep.subr.mxu0 0.0
      %580 = vmatpush1.msra.mxu0 0.0
      %581 = vmatprep.subr.mxu0 0.0
      %582 = vmatpush1.msra.mxu0 0.0
      %583 = vmatprep.subr.mxu0 0.0
      %584 = vmatpush1.msra.mxu0 0.0
      %585 = vmatprep.subr.mxu0 0.0
      %586 = vmatpush1.msra.mxu0 0.0
      %587 = vmatprep.subr.mxu0 0.0
      %588 = vmatpush1.msra.mxu0 0.0
      %589 = vmatprep.subr.mxu0 0.0
      %590 = vmatpush1.msra.mxu0 0.0
      %591 = vmatprep.subr.mxu0 0.0
      %592 = vmatpush1.msra.mxu0 0.0
      %593 = vmatprep.subr.mxu0 0.0
      %594 = vmatpush1.msra.mxu0 0.0
      %595 = vmatprep.subr.mxu0 0.0
      %596 = vmatpush1.msra.mxu0 0.0
      %597 = vmatprep.subr.mxu0 0.0
      %598 = vmatpush1.msra.mxu0 0.0
      %599 = vmatprep.mubr.f32.mxu0 0.0
      %600 = vmatmul.mubr.f32.gmra.mrb[0].mxu0 %v533
      %v601 = vpop.f32.mrb[0].mxu0
      %v602 = vadd.f32 %v534, %v601
      %v603 = vpop.f32.mrb[0].mxu0
      %604 = vdwg.mxu0
      %v605 = vtanh.pop %v602
      %606 = vmatprep.subr.mxu0 0.0
      %607 = vmatpush1.msra.mxu0 %v54
      %608 = vmatprep.subr.mxu0 0.0
      %609 = vmatpush1.msra.mxu0 %v55
      %610 = vmatprep.subr.mxu0 0.0
      %611 = vmatpush1.msra.mxu0 %v56
      %612 = vmatprep.subr.mxu0 0.0
      %613 = vmatpush1.msra.mxu0 %v57
      %614 = vmatprep.subr.mxu0 0.0
      %615 = vmatpush1.msra.mxu0 %v58
      %616 = vmatprep.subr.mxu0 0.0
      %617 = vmatpush1.msra.mxu0 %v59
      %618 = vmatprep.subr.mxu0 0.0
      %619 = vmatpush1.msra.mxu0 %v60
      %620 = vmatprep.subr.mxu0 0.0
      %621 = vmatpush1.msra.mxu0 %v61
      %622 = vmatprep.subr.mxu0 0.0
      %623 = vmatpush1.msra.mxu0 %v62
      %624 = vmatprep.subr.mxu0 0.0
      %625 = vmatpush1.msra.mxu0 %v63
      %626 = vmatprep.subr.mxu0 0.0
      %627 = vmatpush1.msra.mxu0 %v64
      %628 = vmatprep.subr.mxu0 0.0
      %629 = vmatpush1.msra.mxu0 %v65
      %630 = vmatprep.subr.mxu0 0.0
      %631 = vmatpush1.msra.mxu0 %v66
      %632 = vmatprep.subr.mxu0 0.0
      %633 = vmatpush1.msra.mxu0 %v67
      %634 = vmatprep.subr.mxu0 0.0
      %635 = vmatpush1.msra.mxu0 %v68
      %636 = vmatprep.subr.mxu0 0.0
      %637 = vmatpush1.msra.mxu0 %v69
      %638 = vmatprep.subr.mxu0 0.0
      %639 = vmatpush1.msra.mxu0 0.0
      %640 = vmatprep.subr.mxu0 0.0
      %641 = vmatpush1.msra.mxu0 0.0
      %642 = vmatprep.subr.mxu0 0.0
      %643 = vmatpush1.msra.mxu0 0.0
      %644 = vmatprep.subr.mxu0 0.0
      %645 = vmatpush1.msra.mxu0 0.0
      %646 = vmatprep.subr.mxu0 0.0
      %647 = vmatpush1.msra.mxu0 0.0
      %648 = vmatprep.subr.mxu0 0.0
      %649 = vmatpush1.msra.mxu0 0.0
      %650 = vmatprep.subr.mxu0 0.0
      %651 = vmatpush1.msra.mxu0 0.0
      %652 = vmatprep.subr.mxu0 0.0
      %653 = vmatpush1.msra.mxu0 0.0
      %654 = vmatprep.subr.mxu0 0.0
      %655 = vmatpush1.msra.mxu0 0.0
      %656 = vmatprep.subr.mxu0 0.0
      %657 = vmatpush1.msra.mxu0 0.0
      %658 = vmatprep.subr.mxu0 0.0
      %659 = vmatpush1.msra.mxu0 0.0
      %660 = vmatprep.subr.mxu0 0.0
      %661 = vmatpush1.msra.mxu0 0.0
      %662 = vmatprep.subr.mxu0 0.0
      %663 = vmatpush1.msra.mxu0 0.0
      %664 = vmatprep.subr.mxu0 0.0
      %665 = vmatpush1.msra.mxu0 0.0
      %666 = vmatprep.subr.mxu0 0.0
      %667 = vmatpush1.msra.mxu0 0.0
      %668 = vmatprep.subr.mxu0 0.0
      %669 = vmatpush1.msra.mxu0 0.0
      %670 = vmatprep.mubr.f32.mxu0 0.0
      %671 = vmatmul.mubr.f32.gmra.mrb[0].mxu0 %v605
      %v672 = vpop.f32.mrb[0].mxu0
      %v673 = vadd.f32 %v82, %v672
      %v674 = vpop.f32.mrb[0].mxu0
      %675 = vdwg.mxu0
      %v676 = vmul.f32 %v673, %v387
      %v677 = vadd.f32 %v389, %v676
      %v678 = vadd.f32 %v390, %v387
      %679 = vmatprep.subr.mxu0 0.0
      %680 = vmatpush1.msra.mxu0 %v38
      %681 = vmatprep.subr.mxu0 0.0
      %682 = vmatpush1.msra.mxu0 %v39
      %683 = vmatprep.subr.mxu0 0.0
      %684 = vmatpush1.msra.mxu0 %v40
      %685 = vmatprep.subr.mxu0 0.0
      %686 = vmatpush1.msra.mxu0 %v41
      %687 = vmatprep.subr.mxu0 0.0
      %688 = vmatpush1.msra.mxu0 %v42
      %689 = vmatprep.subr.mxu0 0.0
      %690 = vmatpush1.msra.mxu0 %v43
      %691 = vmatprep.subr.mxu0 0.0
      %692 = vmatpush1.msra.mxu0 %v44
      %693 = vmatprep.subr.mxu0 0.0
      %694 = vmatpush1.msra.mxu0 %v45
      %695 = vmatprep.subr.mxu0 0.0
      %696 = vmatpush1.msra.mxu0 %v46
      %697 = vmatprep.subr.mxu0 0.0
      %698 = vmatpush1.msra.mxu0 %v47
      %699 = vmatprep.subr.mxu0 0.0
      %700 = vmatpush1.msra.mxu0 %v48
      %701 = vmatprep.subr.mxu0 0.0
      %702 = vmatpush1.msra.mxu0 %v49
      %703 = vmatprep.subr.mxu0 0.0
      %704 = vmatpush1.msra.mxu0 %v50
      %705 = vmatprep.subr.mxu0 0.0
      %706 = vmatpush1.msra.mxu0 %v51
      %707 = vmatprep.subr.mxu0 0.0
      %708 = vmatpush1.msra.mxu0 %v52
      %709 = vmatprep.subr.mxu0 0.0
      %710 = vmatpush1.msra.mxu0 %v53
      %711 = vmatprep.subr.mxu0 0.0
      %712 = vmatpush1.msra.mxu0 0.0
      %713 = vmatprep.subr.mxu0 0.0
      %714 = vmatpush1.msra.mxu0 0.0
      %715 = vmatprep.subr.mxu0 0.0
      %716 = vmatpush1.msra.mxu0 0.0
      %717 = vmatprep.subr.mxu0 0.0
      %718 = vmatpush1.msra.mxu0 0.0
      %719 = vmatprep.subr.mxu0 0.0
      %720 = vmatpush1.msra.mxu0 0.0
      %721 = vmatprep.subr.mxu0 0.0
      %722 = vmatpush1.msra.mxu0 0.0
      %723 = vmatprep.subr.mxu0 0.0
      %724 = vmatpush1.msra.mxu0 0.0
      %725 = vmatprep.subr.mxu0 0.0
      %726 = vmatpush1.msra.mxu0 0.0
      %727 = vmatprep.subr.mxu0 0.0
      %728 = vmatpush1.msra.mxu0 0.0
      %729 = vmatprep.subr.mxu0 0.0
      %730 = vmatpush1.msra.mxu0 0.0
      %731 = vmatprep.subr.mxu0 0.0
      %732 = vmatpush1.msra.mxu0 0.0
      %733 = vmatprep.subr.mxu0 0.0
      %734 = vmatpush1.msra.mxu0 0.0
      %735 = vmatprep.subr.mxu0 0.0
      %736 = vmatpush1.msra.mxu0 0.0
      %737 = vmatprep.subr.mxu0 0.0
      %738 = vmatpush1.msra.mxu0 0.0
      %739 = vmatprep.subr.mxu0 0.0
      %740 = vmatpush1.msra.mxu0 0.0
      %741 = vmatprep.subr.mxu0 0.0
      %742 = vmatpush1.msra.mxu0 0.0
      %743 = vmatprep.mubr.f32.mxu0 0.0
      %744 = vmatmul.mubr.f32.gmra.mrb[0].mxu0 %v677
      %v745 = vpop.f32.mrb[0].mxu0
      %v746 = vadd.f32 %v678, %v745
      %v747 = vpop.f32.mrb[0].mxu0
      %748 = vdwg.mxu0
      %v749 = vtanh.pop %v746
      %750 = vmatprep.subr.mxu0 0.0
      %751 = vmatpush1.msra.mxu0 %v54
      %752 = vmatprep.subr.mxu0 0.0
      %753 = vmatpush1.msra.mxu0 %v55
      %754 = vmatprep.subr.mxu0 0.0
      %755 = vmatpush1.msra.mxu0 %v56
      %756 = vmatprep.subr.mxu0 0.0
      %757 = vmatpush1.msra.mxu0 %v57
      %758 = vmatprep.subr.mxu0 0.0
      %759 = vmatpush1.msra.mxu0 %v58
      %760 = vmatprep.subr.mxu0 0.0
      %761 = vmatpush1.msra.mxu0 %v59
      %762 = vmatprep.subr.mxu0 0.0
      %763 = vmatpush1.msra.mxu0 %v60
      %764 = vmatprep.subr.mxu0 0.0
      %765 = vmatpush1.msra.mxu0 %v61
      %766 = vmatprep.subr.mxu0 0.0
      %767 = vmatpush1.msra.mxu0 %v62
      %768 = vmatprep.subr.mxu0 0.0
      %769 = vmatpush1.msra.mxu0 %v63
      %770 = vmatprep.subr.mxu0 0.0
      %771 = vmatpush1.msra.mxu0 %v64
      %772 = vmatprep.subr.mxu0 0.0
      %773 = vmatpush1.msra.mxu0 %v65
      %774 = vmatprep.subr.mxu0 0.0
      %775 = vmatpush1.msra.mxu0 %v66
      %776 = vmatprep.subr.mxu0 0.0
      %777 = vmatpush1.msra.mxu0 %v67
      %778 = vmatprep.subr.mxu0 0.0
      %779 = vmatpush1.msra.mxu0 %v68
      %780 = vmatprep.subr.mxu0 0.0
      %781 = vmatpush1.msra.mxu0 %v69
      %782 = vmatprep.subr.mxu0 0.0
      %783 = vmatpush1.msra.mxu0 0.0
      %784 = vmatprep.subr.mxu0 0.0
      %785 = vmatpush1.msra.mxu0 0.0
      %786 = vmatprep.subr.mxu0 0.0
      %787 = vmatpush1.msra.mxu0 0.0
      %788 = vmatprep.subr.mxu0 0.0
      %789 = vmatpush1.msra.mxu0 0.0
      %790 = vmatprep.subr.mxu0 0.0
      %791 = vmatpush1.msra.mxu0 0.0
      %792 = vmatprep.subr.mxu0 0.0
      %793 = vmatpush1.msra.mxu0 0.0
      %794 = vmatprep.subr.mxu0 0.0
      %795 = vmatpush1.msra.mxu0 0.0
      %796 = vmatprep.subr.mxu0 0.0
      %797 = vmatpush1.msra.mxu0 0.0
      %798 = vmatprep.subr.mxu0 0.0
      %799 = vmatpush1.msra.mxu0 0.0
      %800 = vmatprep.subr.mxu0 0.0
      %801 = vmatpush1.msra.mxu0 0.0
      %802 = vmatprep.subr.mxu0 0.0
      %803 = vmatpush1.msra.mxu0 0.0
      %804 = vmatprep.subr.mxu0 0.0
      %805 = vmatpush1.msra.mxu0 0.0
      %806 = vmatprep.subr.mxu0 0.0
      %807 = vmatpush1.msra.mxu0 0.0
      %808 = vmatprep.subr.mxu0 0.0
      %809 = vmatpush1.msra.mxu0 0.0
      %810 = vmatprep.subr.mxu0 0.0
      %811 = vmatpush1.msra.mxu0 0.0
      %812 = vmatprep.subr.mxu0 0.0
      %813 = vmatpush1.msra.mxu0 0.0
      %814 = vmatprep.mubr.f32.mxu0 0.0
      %815 = vmatmul.mubr.f32.gmra.mrb[0].mxu0 %v749
      %v816 = vpop.f32.mrb[0].mxu0
      %v817 = vadd.f32 %v82, %v816
      %v818 = vpop.f32.mrb[0].mxu0
      %819 = vdwg.mxu0
      %v820 = vmul.f32 %v817, %v242
      %v821 = vadd.f32 %v677, %v820
      %v822 = vadd.f32 %v678, %v242
      %823 = vmatprep.subr.mxu0 0.0
      %824 = vmatpush1.msra.mxu0 %v38
      %825 = vmatprep.subr.mxu0 0.0
      %826 = vmatpush1.msra.mxu0 %v39
      %827 = vmatprep.subr.mxu0 0.0
      %828 = vmatpush1.msra.mxu0 %v40
      %829 = vmatprep.subr.mxu0 0.0
      %830 = vmatpush1.msra.mxu0 %v41
      %831 = vmatprep.subr.mxu0 0.0
      %832 = vmatpush1.msra.mxu0 %v42
      %833 = vmatprep.subr.mxu0 0.0
      %834 = vmatpush1.msra.mxu0 %v43
      %835 = vmatprep.subr.mxu0 0.0
      %836 = vmatpush1.msra.mxu0 %v44
      %837 = vmatprep.subr.mxu0 0.0
      %838 = vmatpush1.msra.mxu0 %v45
      %839 = vmatprep.subr.mxu0 0.0
      %840 = vmatpush1.msra.mxu0 %v46
      %841 = vmatprep.subr.mxu0 0.0
      %842 = vmatpush1.msra.mxu0 %v47
      %843 = vmatprep.subr.mxu0 0.0
      %844 = vmatpush1.msra.mxu0 %v48
      %845 = vmatprep.subr.mxu0 0.0
      %846 = vmatpush1.msra.mxu0 %v49
      %847 = vmatprep.subr.mxu0 0.0
      %848 = vmatpush1.msra.mxu0 %v50
      %849 = vmatprep.subr.mxu0 0.0
      %850 = vmatpush1.msra.mxu0 %v51
      %851 = vmatprep.subr.mxu0 0.0
      %852 = vmatpush1.msra.mxu0 %v52
      %853 = vmatprep.subr.mxu0 0.0
      %854 = vmatpush1.msra.mxu0 %v53
      %855 = vmatprep.subr.mxu0 0.0
      %856 = vmatpush1.msra.mxu0 0.0
      %857 = vmatprep.subr.mxu0 0.0
      %858 = vmatpush1.msra.mxu0 0.0
      %859 = vmatprep.subr.mxu0 0.0
      %860 = vmatpush1.msra.mxu0 0.0
      %861 = vmatprep.subr.mxu0 0.0
      %862 = vmatpush1.msra.mxu0 0.0
      %863 = vmatprep.subr.mxu0 0.0
      %864 = vmatpush1.msra.mxu0 0.0
      %865 = vmatprep.subr.mxu0 0.0
      %866 = vmatpush1.msra.mxu0 0.0
      %867 = vmatprep.subr.mxu0 0.0
      %868 = vmatpush1.msra.mxu0 0.0
      %869 = vmatprep.subr.mxu0 0.0
      %870 = vmatpush1.msra.mxu0 0.0
      %871 = vmatprep.subr.mxu0 0.0
      %872 = vmatpush1.msra.mxu0 0.0
      %873 = vmatprep.subr.mxu0 0.0
      %874 = vmatpush1.msra.mxu0 0.0
      %875 = vmatprep.subr.mxu0 0.0
      %876 = vmatpush1.msra.mxu0 0.0
      %877 = vmatprep.subr.mxu0 0.0
      %878 = vmatpush1.msra.mxu0 0.0
      %879 = vmatprep.subr.mxu0 0.0
      %880 = vmatpush1.msra.mxu0 0.0
      %881 = vmatprep.subr.mxu0 0.0
      %882 = vmatpush1.msra.mxu0 0.0
      %883 = vmatprep.subr.mxu0 0.0
      %884 = vmatpush1.msra.mxu0 0.0
      %885 = vmatprep.subr.mxu0 0.0
      %886 = vmatpush1.msra.mxu0 0.0
      %887 = vmatprep.mubr.f32.mxu0 0.0
      %888 = vmatmul.mubr.f32.gmra.mrb[0].mxu0 %v821
      %v889 = vpop.f32.mrb[0].mxu0
      %v890 = vadd.f32 %v822, %v889
      %v891 = vpop.f32.mrb[0].mxu0
      %892 = vdwg.mxu0
      %v893 = vtanh.pop %v890
      %894 = vmatprep.subr.mxu0 0.0
      %895 = vmatpush1.msra.mxu0 %v54
      %896 = vmatprep.subr.mxu0 0.0
      %897 = vmatpush1.msra.mxu0 %v55
      %898 = vmatprep.subr.mxu0 0.0
      %899 = vmatpush1.msra.mxu0 %v56
      %900 = vmatprep.subr.mxu0 0.0
      %901 = vmatpush1.msra.mxu0 %v57
      %902 = vmatprep.subr.mxu0 0.0
      %903 = vmatpush1.msra.mxu0 %v58
      %904 = vmatprep.subr.mxu0 0.0
      %905 = vmatpush1.msra.mxu0 %v59
      %906 = vmatprep.subr.mxu0 0.0
      %907 = vmatpush1.msra.mxu0 %v60
      %908 = vmatprep.subr.mxu0 0.0
      %909 = vmatpush1.msra.mxu0 %v61
      %910 = vmatprep.subr.mxu0 0.0
      %911 = vmatpush1.msra.mxu0 %v62
      %912 = vmatprep.subr.mxu0 0.0
      %913 = vmatpush1.msra.mxu0 %v63
      %914 = vmatprep.subr.mxu0 0.0
      %915 = vmatpush1.msra.mxu0 %v64
      %916 = vmatprep.subr.mxu0 0.0
      %917 = vmatpush1.msra.mxu0 %v65
      %918 = vmatprep.subr.mxu0 0.0
      %919 = vmatpush1.msra.mxu0 %v66
      %920 = vmatprep.subr.mxu0 0.0
      %921 = vmatpush1.msra.mxu0 %v67
      %922 = vmatprep.subr.mxu0 0.0
      %923 = vmatpush1.msra.mxu0 %v68
      %924 = vmatprep.subr.mxu0 0.0
      %925 = vmatpush1.msra.mxu0 %v69
      %926 = vmatprep.subr.mxu0 0.0
      %927 = vmatpush1.msra.mxu0 0.0
      %928 = vmatprep.subr.mxu0 0.0
      %929 = vmatpush1.msra.mxu0 0.0
      %930 = vmatprep.subr.mxu0 0.0
      %931 = vmatpush1.msra.mxu0 0.0
      %932 = vmatprep.subr.mxu0 0.0
      %933 = vmatpush1.msra.mxu0 0.0
      %934 = vmatprep.subr.mxu0 0.0
      %935 = vmatpush1.msra.mxu0 0.0
      %936 = vmatprep.subr.mxu0 0.0
      %937 = vmatpush1.msra.mxu0 0.0
      %938 = vmatprep.subr.mxu0 0.0
      %939 = vmatpush1.msra.mxu0 0.0
      %940 = vmatprep.subr.mxu0 0.0
      %941 = vmatpush1.msra.mxu0 0.0
      %942 = vmatprep.subr.mxu0 0.0
      %943 = vmatpush1.msra.mxu0 0.0
      %944 = vmatprep.subr.mxu0 0.0
      %945 = vmatpush1.msra.mxu0 0.0
      %946 = vmatprep.subr.mxu0 0.0
      %947 = vmatpush1.msra.mxu0 0.0
      %948 = vmatprep.subr.mxu0 0.0
      %949 = vmatpush1.msra.mxu0 0.0
      %950 = vmatprep.subr.mxu0 0.0
      %951 = vmatpush1.msra.mxu0 0.0
      %952 = vmatprep.subr.mxu0 0.0
      %953 = vmatpush1.msra.mxu0 0.0
      %954 = vmatprep.subr.mxu0 0.0
      %955 = vmatpush1.msra.mxu0 0.0
      %956 = vmatprep.subr.mxu0 0.0
      %957 = vmatpush1.msra.mxu0 0.0
      %958 = vmatprep.mubr.f32.mxu0 0.0
      %959 = vmatmul.mubr.f32.gmra.mrb[0].mxu0 %v893
      %v960 = vpop.f32.mrb[0].mxu0
      %v961 = vadd.f32 %v82, %v960
      %v962 = vpop.f32.mrb[0].mxu0
      %963 = vdwg.mxu0
      %v964 = vmul.f32 %v961, %v387
      %v965 = vadd.f32 %v677, %v964
      %v966 = vadd.f32 %v678, %v387
      %967 = vmatprep.subr.mxu0 0.0
      %968 = vmatpush1.msra.mxu0 %v38
      %969 = vmatprep.subr.mxu0 0.0
      %970 = vmatpush1.msra.mxu0 %v39
      %971 = vmatprep.subr.mxu0 0.0
      %972 = vmatpush1.msra.mxu0 %v40
      %973 = vmatprep.subr.mxu0 0.0
      %974 = vmatpush1.msra.mxu0 %v41
      %975 = vmatprep.subr.mxu0 0.0
      %976 = vmatpush1.msra.mxu0 %v42
      %977 = vmatprep.subr.mxu0 0.0
      %978 = vmatpush1.msra.mxu0 %v43
      %979 = vmatprep.subr.mxu0 0.0
      %980 = vmatpush1.msra.mxu0 %v44
      %981 = vmatprep.subr.mxu0 0.0
      %982 = vmatpush1.msra.mxu0 %v45
      %983 = vmatprep.subr.mxu0 0.0
      %984 = vmatpush1.msra.mxu0 %v46
      %985 = vmatprep.subr.mxu0 0.0
      %986 = vmatpush1.msra.mxu0 %v47
      %987 = vmatprep.subr.mxu0 0.0
      %988 = vmatpush1.msra.mxu0 %v48
      %989 = vmatprep.subr.mxu0 0.0
      %990 = vmatpush1.msra.mxu0 %v49
      %991 = vmatprep.subr.mxu0 0.0
      %992 = vmatpush1.msra.mxu0 %v50
      %993 = vmatprep.subr.mxu0 0.0
      %994 = vmatpush1.msra.mxu0 %v51
      %995 = vmatprep.subr.mxu0 0.0
      %996 = vmatpush1.msra.mxu0 %v52
      %997 = vmatprep.subr.mxu0 0.0
      %998 = vmatpush1.msra.mxu0 %v53
      %999 = vmatprep.subr.mxu0 0.0
      %1000 = vmatpush1.msra.mxu0 0.0
      %1001 = vmatprep.subr.mxu0 0.0
      %1002 = vmatpush1.msra.mxu0 0.0
      %1003 = vmatprep.subr.mxu0 0.0
      %1004 = vmatpush1.msra.mxu0 0.0
      %1005 = vmatprep.subr.mxu0 0.0
      %1006 = vmatpush1.msra.mxu0 0.0
      %1007 = vmatprep.subr.mxu0 0.0
      %1008 = vmatpush1.msra.mxu0 0.0
      %1009 = vmatprep.subr.mxu0 0.0
      %1010 = vmatpush1.msra.mxu0 0.0
      %1011 = vmatprep.subr.mxu0 0.0
      %1012 = vmatpush1.msra.mxu0 0.0
      %1013 = vmatprep.subr.mxu0 0.0
      %1014 = vmatpush1.msra.mxu0 0.0
      %1015 = vmatprep.subr.mxu0 0.0
      %1016 = vmatpush1.msra.mxu0 0.0
      %1017 = vmatprep.subr.mxu0 0.0
      %1018 = vmatpush1.msra.mxu0 0.0
      %1019 = vmatprep.subr.mxu0 0.0
      %1020 = vmatpush1.msra.mxu0 0.0
      %1021 = vmatprep.subr.mxu0 0.0
      %1022 = vmatpush1.msra.mxu0 0.0
      %1023 = vmatprep.subr.mxu0 0.0
      %1024 = vmatpush1.msra.mxu0 0.0
      %1025 = vmatprep.subr.mxu0 0.0
      %1026 = vmatpush1.msra.mxu0 0.0
      %1027 = vmatprep.subr.mxu0 0.0
      %1028 = vmatpush1.msra.mxu0 0.0
      %1029 = vmatprep.subr.mxu0 0.0
      %1030 = vmatpush1.msra.mxu0 0.0
      %1031 = vmatprep.mubr.f32.mxu0 0.0
      %1032 = vmatmul.mubr.f32.gmra.mrb[0].mxu0 %v965
      %v1033 = vpop.f32.mrb[0].mxu0
      %v1034 = vadd.f32 %v966, %v1033
      %v1035 = vpop.f32.mrb[0].mxu0
      %1036 = vdwg.mxu0
      %v1037 = vtanh.pop %v1034
      %1038 = vmatprep.subr.mxu0 0.0
      %1039 = vmatpush1.msra.mxu0 %v54
      %1040 = vmatprep.subr.mxu0 0.0
      %1041 = vmatpush1.msra.mxu0 %v55
      %1042 = vmatprep.subr.mxu0 0.0
      %1043 = vmatpush1.msra.mxu0 %v56
      %1044 = vmatprep.subr.mxu0 0.0
      %1045 = vmatpush1.msra.mxu0 %v57
      %1046 = vmatprep.subr.mxu0 0.0
      %1047 = vmatpush1.msra.mxu0 %v58
      %1048 = vmatprep.subr.mxu0 0.0
      %1049 = vmatpush1.msra.mxu0 %v59
      %1050 = vmatprep.subr.mxu0 0.0
      %1051 = vmatpush1.msra.mxu0 %v60
      %1052 = vmatprep.subr.mxu0 0.0
      %1053 = vmatpush1.msra.mxu0 %v61
      %1054 = vmatprep.subr.mxu0 0.0
      %1055 = vmatpush1.msra.mxu0 %v62
      %1056 = vmatprep.subr.mxu0 0.0
      %1057 = vmatpush1.msra.mxu0 %v63
      %1058 = vmatprep.subr.mxu0 0.0
      %1059 = vmatpush1.msra.mxu0 %v64
      %1060 = vmatprep.subr.mxu0 0.0
      %1061 = vmatpush1.msra.mxu0 %v65
      %1062 = vmatprep.subr.mxu0 0.0
      %1063 = vmatpush1.msra.mxu0 %v66
      %1064 = vmatprep.subr.mxu0 0.0
      %1065 = vmatpush1.msra.mxu0 %v67
      %1066 = vmatprep.subr.mxu0 0.0
      %1067 = vmatpush1.msra.mxu0 %v68
      %1068 = vmatprep.subr.mxu0 0.0
      %1069 = vmatpush1.msra.mxu0 %v69
      %1070 = vmatprep.subr.mxu0 0.0
      %1071 = vmatpush1.msra.mxu0 0.0
      %1072 = vmatprep.subr.mxu0 0.0
      %1073 = vmatpush1.msra.mxu0 0.0
      %1074 = vmatprep.subr.mxu0 0.0
      %1075 = vmatpush1.msra.mxu0 0.0
      %1076 = vmatprep.subr.mxu0 0.0
      %1077 = vmatpush1.msra.mxu0 0.0
      %1078 = vmatprep.subr.mxu0 0.0
      %1079 = vmatpush1.msra.mxu0 0.0
      %1080 = vmatprep.subr.mxu0 0.0
      %1081 = vmatpush1.msra.mxu0 0.0
      %1082 = vmatprep.subr.mxu0 0.0
      %1083 = vmatpush1.msra.mxu0 0.0
      %1084 = vmatprep.subr.mxu0 0.0
      %1085 = vmatpush1.msra.mxu0 0.0
      %1086 = vmatprep.subr.mxu0 0.0
      %1087 = vmatpush1.msra.mxu0 0.0
      %1088 = vmatprep.subr.mxu0 0.0
      %1089 = vmatpush1.msra.mxu0 0.0
      %1090 = vmatprep.subr.mxu0 0.0
      %1091 = vmatpush1.msra.mxu0 0.0
      %1092 = vmatprep.subr.mxu0 0.0
      %1093 = vmatpush1.msra.mxu0 0.0
      %1094 = vmatprep.subr.mxu0 0.0
      %1095 = vmatpush1.msra.mxu0 0.0
      %1096 = vmatprep.subr.mxu0 0.0
      %1097 = vmatpush1.msra.mxu0 0.0
      %1098 = vmatprep.subr.mxu0 0.0
      %1099 = vmatpush1.msra.mxu0 0.0
      %1100 = vmatprep.subr.mxu0 0.0
      %1101 = vmatpush1.msra.mxu0 0.0
      %1102 = vmatprep.mubr.f32.mxu0 0.0
      %1103 = vmatmul.mubr.f32.gmra.mrb[0].mxu0 %v1037
      %v1104 = vpop.f32.mrb[0].mxu0
      %v1105 = vadd.f32 %v82, %v1104
      %v1106 = vpop.f32.mrb[0].mxu0
      %1107 = vdwg.mxu0
      %v1108 = vmul.f32 %v1105, %v242
      %v1109 = vadd.f32 %v965, %v1108
      %v1110 = vadd.f32 %v966, %v242
      %1111 = vmatprep.subr.mxu0 0.0
      %1112 = vmatpush1.msra.mxu0 %v38
      %1113 = vmatprep.subr.mxu0 0.0
      %1114 = vmatpush1.msra.mxu0 %v39
      %1115 = vmatprep.subr.mxu0 0.0
      %1116 = vmatpush1.msra.mxu0 %v40
      %1117 = vmatprep.subr.mxu0 0.0
      %1118 = vmatpush1.msra.mxu0 %v41
      %1119 = vmatprep.subr.mxu0 0.0
      %1120 = vmatpush1.msra.mxu0 %v42
      %1121 = vmatprep.subr.mxu0 0.0
      %1122 = vmatpush1.msra.mxu0 %v43
      %1123 = vmatprep.subr.mxu0 0.0
      %1124 = vmatpush1.msra.mxu0 %v44
      %1125 = vmatprep.subr.mxu0 0.0
      %1126 = vmatpush1.msra.mxu0 %v45
      %1127 = vmatprep.subr.mxu0 0.0
      %1128 = vmatpush1.msra.mxu0 %v46
      %1129 = vmatprep.subr.mxu0 0.0
      %1130 = vmatpush1.msra.mxu0 %v47
      %1131 = vmatprep.subr.mxu0 0.0
      %1132 = vmatpush1.msra.mxu0 %v48
      %1133 = vmatprep.subr.mxu0 0.0
      %1134 = vmatpush1.msra.mxu0 %v49
      %1135 = vmatprep.subr.mxu0 0.0
      %1136 = vmatpush1.msra.mxu0 %v50
      %1137 = vmatprep.subr.mxu0 0.0
      %1138 = vmatpush1.msra.mxu0 %v51
      %1139 = vmatprep.subr.mxu0 0.0
      %1140 = vmatpush1.msra.mxu0 %v52
      %1141 = vmatprep.subr.mxu0 0.0
      %1142 = vmatpush1.msra.mxu0 %v53
      %1143 = vmatprep.subr.mxu0 0.0
      %1144 = vmatpush1.msra.mxu0 0.0
      %1145 = vmatprep.subr.mxu0 0.0
      %1146 = vmatpush1.msra.mxu0 0.0
      %1147 = vmatprep.subr.mxu0 0.0
      %1148 = vmatpush1.msra.mxu0 0.0
      %1149 = vmatprep.subr.mxu0 0.0
      %1150 = vmatpush1.msra.mxu0 0.0
      %1151 = vmatprep.subr.mxu0 0.0
      %1152 = vmatpush1.msra.mxu0 0.0
      %1153 = vmatprep.subr.mxu0 0.0
      %1154 = vmatpush1.msra.mxu0 0.0
      %1155 = vmatprep.subr.mxu0 0.0
      %1156 = vmatpush1.msra.mxu0 0.0
      %1157 = vmatprep.subr.mxu0 0.0
      %1158 = vmatpush1.msra.mxu0 0.0
      %1159 = vmatprep.subr.mxu0 0.0
      %1160 = vmatpush1.msra.mxu0 0.0
      %1161 = vmatprep.subr.mxu0 0.0
      %1162 = vmatpush1.msra.mxu0 0.0
      %1163 = vmatprep.subr.mxu0 0.0
      %1164 = vmatpush1.msra.mxu0 0.0
      %1165 = vmatprep.subr.mxu0 0.0
      %1166 = vmatpush1.msra.mxu0 0.0
      %1167 = vmatprep.subr.mxu0 0.0
      %1168 = vmatpush1.msra.mxu0 0.0
      %1169 = vmatprep.subr.mxu0 0.0
      %1170 = vmatpush1.msra.mxu0 0.0
      %1171 = vmatprep.subr.mxu0 0.0
      %1172 = vmatpush1.msra.mxu0 0.0
      %1173 = vmatprep.subr.mxu0 0.0
      %1174 = vmatpush1.msra.mxu0 0.0
      %1175 = vmatprep.mubr.f32.mxu0 0.0
      %1176 = vmatmul.mubr.f32.gmra.mrb[0].mxu0 %v1109
      %v1177 = vpop.f32.mrb[0].mxu0
      %v1178 = vadd.f32 %v1110, %v1177
      %v1179 = vpop.f32.mrb[0].mxu0
      %1180 = vdwg.mxu0
      %v1181 = vtanh.pop %v1178
      %1182 = vmatprep.subr.mxu0 0.0
      %1183 = vmatpush1.msra.mxu0 %v54
      %1184 = vmatprep.subr.mxu0 0.0
      %1185 = vmatpush1.msra.mxu0 %v55
      %1186 = vmatprep.subr.mxu0 0.0
      %1187 = vmatpush1.msra.mxu0 %v56
      %1188 = vmatprep.subr.mxu0 0.0
      %1189 = vmatpush1.msra.mxu0 %v57
      %1190 = vmatprep.subr.mxu0 0.0
      %1191 = vmatpush1.msra.mxu0 %v58
      %1192 = vmatprep.subr.mxu0 0.0
      %1193 = vmatpush1.msra.mxu0 %v59
      %1194 = vmatprep.subr.mxu0 0.0
      %1195 = vmatpush1.msra.mxu0 %v60
      %1196 = vmatprep.subr.mxu0 0.0
      %1197 = vmatpush1.msra.mxu0 %v61
      %1198 = vmatprep.subr.mxu0 0.0
      %1199 = vmatpush1.msra.mxu0 %v62
      %1200 = vmatprep.subr.mxu0 0.0
      %1201 = vmatpush1.msra.mxu0 %v63
      %1202 = vmatprep.subr.mxu0 0.0
      %1203 = vmatpush1.msra.mxu0 %v64
      %1204 = vmatprep.subr.mxu0 0.0
      %1205 = vmatpush1.msra.mxu0 %v65
      %1206 = vmatprep.subr.mxu0 0.0
      %1207 = vmatpush1.msra.mxu0 %v66
      %1208 = vmatprep.subr.mxu0 0.0
      %1209 = vmatpush1.msra.mxu0 %v67
      %1210 = vmatprep.subr.mxu0 0.0
      %1211 = vmatpush1.msra.mxu0 %v68
      %1212 = vmatprep.subr.mxu0 0.0
      %1213 = vmatpush1.msra.mxu0 %v69
      %1214 = vmatprep.subr.mxu0 0.0
      %1215 = vmatpush1.msra.mxu0 0.0
      %1216 = vmatprep.subr.mxu0 0.0
      %1217 = vmatpush1.msra.mxu0 0.0
      %1218 = vmatprep.subr.mxu0 0.0
      %1219 = vmatpush1.msra.mxu0 0.0
      %1220 = vmatprep.subr.mxu0 0.0
      %1221 = vmatpush1.msra.mxu0 0.0
      %1222 = vmatprep.subr.mxu0 0.0
      %1223 = vmatpush1.msra.mxu0 0.0
      %1224 = vmatprep.subr.mxu0 0.0
      %1225 = vmatpush1.msra.mxu0 0.0
      %1226 = vmatprep.subr.mxu0 0.0
      %1227 = vmatpush1.msra.mxu0 0.0
      %1228 = vmatprep.subr.mxu0 0.0
      %1229 = vmatpush1.msra.mxu0 0.0
      %1230 = vmatprep.subr.mxu0 0.0
      %1231 = vmatpush1.msra.mxu0 0.0
      %1232 = vmatprep.subr.mxu0 0.0
      %1233 = vmatpush1.msra.mxu0 0.0
      %1234 = vmatprep.subr.mxu0 0.0
      %1235 = vmatpush1.msra.mxu0 0.0
      %1236 = vmatprep.subr.mxu0 0.0
      %1237 = vmatpush1.msra.mxu0 0.0
      %1238 = vmatprep.subr.mxu0 0.0
      %1239 = vmatpush1.msra.mxu0 0.0
      %1240 = vmatprep.subr.mxu0 0.0
      %1241 = vmatpush1.msra.mxu0 0.0
      %1242 = vmatprep.subr.mxu0 0.0
      %1243 = vmatpush1.msra.mxu0 0.0
      %1244 = vmatprep.subr.mxu0 0.0
      %1245 = vmatpush1.msra.mxu0 0.0
      %1246 = vmatprep.mubr.f32.mxu0 0.0
      %1247 = vmatmul.mubr.f32.gmra.mrb[0].mxu0 %v1181
      %v1248 = vpop.f32.mrb[0].mxu0
      %v1249 = vadd.f32 %v82, %v1248
      %v1250 = vpop.f32.mrb[0].mxu0
      %1251 = vdwg.mxu0
      %v1252 = vmul.f32 %v1249, %v387
      %v1253 = vadd.f32 %v965, %v1252
      %v1254 = vadd.f32 %v966, %v387
      %1255 = vmatprep.subr.mxu0 0.0
      %1256 = vmatpush1.msra.mxu0 %v38
      %1257 = vmatprep.subr.mxu0 0.0
      %1258 = vmatpush1.msra.mxu0 %v39
      %1259 = vmatprep.subr.mxu0 0.0
      %1260 = vmatpush1.msra.mxu0 %v40
      %1261 = vmatprep.subr.mxu0 0.0
      %1262 = vmatpush1.msra.mxu0 %v41
      %1263 = vmatprep.subr.mxu0 0.0
      %1264 = vmatpush1.msra.mxu0 %v42
      %1265 = vmatprep.subr.mxu0 0.0
      %1266 = vmatpush1.msra.mxu0 %v43
      %1267 = vmatprep.subr.mxu0 0.0
      %1268 = vmatpush1.msra.mxu0 %v44
      %1269 = vmatprep.subr.mxu0 0.0
      %1270 = vmatpush1.msra.mxu0 %v45
      %1271 = vmatprep.subr.mxu0 0.0
      %1272 = vmatpush1.msra.mxu0 %v46
      %1273 = vmatprep.subr.mxu0 0.0
      %1274 = vmatpush1.msra.mxu0 %v47
      %1275 = vmatprep.subr.mxu0 0.0
      %1276 = vmatpush1.msra.mxu0 %v48
      %1277 = vmatprep.subr.mxu0 0.0
      %1278 = vmatpush1.msra.mxu0 %v49
      %1279 = vmatprep.subr.mxu0 0.0
      %1280 = vmatpush1.msra.mxu0 %v50
      %1281 = vmatprep.subr.mxu0 0.0
      %1282 = vmatpush1.msra.mxu0 %v51
      %1283 = vmatprep.subr.mxu0 0.0
      %1284 = vmatpush1.msra.mxu0 %v52
      %1285 = vmatprep.subr.mxu0 0.0
      %1286 = vmatpush1.msra.mxu0 %v53
      %1287 = vmatprep.subr.mxu0 0.0
      %1288 = vmatpush1.msra.mxu0 0.0
      %1289 = vmatprep.subr.mxu0 0.0
      %1290 = vmatpush1.msra.mxu0 0.0
      %1291 = vmatprep.subr.mxu0 0.0
      %1292 = vmatpush1.msra.mxu0 0.0
      %1293 = vmatprep.subr.mxu0 0.0
      %1294 = vmatpush1.msra.mxu0 0.0
      %1295 = vmatprep.subr.mxu0 0.0
      %1296 = vmatpush1.msra.mxu0 0.0
      %1297 = vmatprep.subr.mxu0 0.0
      %1298 = vmatpush1.msra.mxu0 0.0
      %1299 = vmatprep.subr.mxu0 0.0
      %1300 = vmatpush1.msra.mxu0 0.0
      %1301 = vmatprep.subr.mxu0 0.0
      %1302 = vmatpush1.msra.mxu0 0.0
      %1303 = vmatprep.subr.mxu0 0.0
      %1304 = vmatpush1.msra.mxu0 0.0
      %1305 = vmatprep.subr.mxu0 0.0
      %1306 = vmatpush1.msra.mxu0 0.0
      %1307 = vmatprep.subr.mxu0 0.0
      %1308 = vmatpush1.msra.mxu0 0.0
      %1309 = vmatprep.subr.mxu0 0.0
      %1310 = vmatpush1.msra.mxu0 0.0
      %1311 = vmatprep.subr.mxu0 0.0
      %1312 = vmatpush1.msra.mxu0 0.0
      %1313 = vmatprep.subr.mxu0 0.0
      %1314 = vmatpush1.msra.mxu0 0.0
      %1315 = vmatprep.subr.mxu0 0.0
      %1316 = vmatpush1.msra.mxu0 0.0
      %1317 = vmatprep.subr.mxu0 0.0
      %1318 = vmatpush1.msra.mxu0 0.0
      %1319 = vmatprep.mubr.f32.mxu0 0.0
      %1320 = vmatmul.mubr.f32.gmra.mrb[0].mxu0 %v1253
      %v1321 = vpop.f32.mrb[0].mxu0
      %v1322 = vadd.f32 %v1254, %v1321
      %v1323 = vpop.f32.mrb[0].mxu0
      %1324 = vdwg.mxu0
      %v1325 = vtanh.pop %v1322
      %1326 = vmatprep.subr.mxu0 0.0
      %1327 = vmatpush1.msra.mxu0 %v54
      %1328 = vmatprep.subr.mxu0 0.0
      %1329 = vmatpush1.msra.mxu0 %v55
      %1330 = vmatprep.subr.mxu0 0.0
      %1331 = vmatpush1.msra.mxu0 %v56
      %1332 = vmatprep.subr.mxu0 0.0
      %1333 = vmatpush1.msra.mxu0 %v57
      %1334 = vmatprep.subr.mxu0 0.0
      %1335 = vmatpush1.msra.mxu0 %v58
      %1336 = vmatprep.subr.mxu0 0.0
      %1337 = vmatpush1.msra.mxu0 %v59
      %1338 = vmatprep.subr.mxu0 0.0
      %1339 = vmatpush1.msra.mxu0 %v60
      %1340 = vmatprep.subr.mxu0 0.0
      %1341 = vmatpush1.msra.mxu0 %v61
      %1342 = vmatprep.subr.mxu0 0.0
      %1343 = vmatpush1.msra.mxu0 %v62
      %1344 = vmatprep.subr.mxu0 0.0
      %1345 = vmatpush1.msra.mxu0 %v63
      %1346 = vmatprep.subr.mxu0 0.0
      %1347 = vmatpush1.msra.mxu0 %v64
      %1348 = vmatprep.subr.mxu0 0.0
      %1349 = vmatpush1.msra.mxu0 %v65
      %1350 = vmatprep.subr.mxu0 0.0
      %1351 = vmatpush1.msra.mxu0 %v66
      %1352 = vmatprep.subr.mxu0 0.0
      %1353 = vmatpush1.msra.mxu0 %v67
      %1354 = vmatprep.subr.mxu0 0.0
      %1355 = vmatpush1.msra.mxu0 %v68
      %1356 = vmatprep.subr.mxu0 0.0
      %1357 = vmatpush1.msra.mxu0 %v69
      %1358 = vmatprep.subr.mxu0 0.0
      %1359 = vmatpush1.msra.mxu0 0.0
      %1360 = vmatprep.subr.mxu0 0.0
      %1361 = vmatpush1.msra.mxu0 0.0
      %1362 = vmatprep.subr.mxu0 0.0
      %1363 = vmatpush1.msra.mxu0 0.0
      %1364 = vmatprep.subr.mxu0 0.0
      %1365 = vmatpush1.msra.mxu0 0.0
      %1366 = vmatprep.subr.mxu0 0.0
      %1367 = vmatpush1.msra.mxu0 0.0
      %1368 = vmatprep.subr.mxu0 0.0
      %1369 = vmatpush1.msra.mxu0 0.0
      %1370 = vmatprep.subr.mxu0 0.0
      %1371 = vmatpush1.msra.mxu0 0.0
      %1372 = vmatprep.subr.mxu0 0.0
      %1373 = vmatpush1.msra.mxu0 0.0
      %1374 = vmatprep.subr.mxu0 0.0
      %1375 = vmatpush1.msra.mxu0 0.0
      %1376 = vmatprep.subr.mxu0 0.0
      %1377 = vmatpush1.msra.mxu0 0.0
      %1378 = vmatprep.subr.mxu0 0.0
      %1379 = vmatpush1.msra.mxu0 0.0
      %1380 = vmatprep.subr.mxu0 0.0
      %1381 = vmatpush1.msra.mxu0 0.0
      %1382 = vmatprep.subr.mxu0 0.0
      %1383 = vmatpush1.msra.mxu0 0.0
      %1384 = vmatprep.subr.mxu0 0.0
      %1385 = vmatpush1.msra.mxu0 0.0
      %1386 = vmatprep.subr.mxu0 0.0
      %1387 = vmatpush1.msra.mxu0 0.0
      %1388 = vmatprep.subr.mxu0 0.0
      %1389 = vmatpush1.msra.mxu0 0.0
      %1390 = vmatprep.mubr.f32.mxu0 0.0
      %1391 = vmatmul.mubr.f32.gmra.mrb[0].mxu0 %v1325
      %v1392 = vpop.f32.mrb[0].mxu0
      %v1393 = vadd.f32 %v82, %v1392
      %v1394 = vpop.f32.mrb[0].mxu0
      %1395 = vdwg.mxu0
      %v1396 = vmul.f32 %v1393, %v242
      %v1397 = vadd.f32 %v1253, %v1396
      %v1398 = vadd.f32 %v1254, %v242
      %1399 = vmatprep.subr.mxu0 0.0
      %1400 = vmatpush1.msra.mxu0 %v38
      %1401 = vmatprep.subr.mxu0 0.0
      %1402 = vmatpush1.msra.mxu0 %v39
      %1403 = vmatprep.subr.mxu0 0.0
      %1404 = vmatpush1.msra.mxu0 %v40
      %1405 = vmatprep.subr.mxu0 0.0
      %1406 = vmatpush1.msra.mxu0 %v41
      %1407 = vmatprep.subr.mxu0 0.0
      %1408 = vmatpush1.msra.mxu0 %v42
      %1409 = vmatprep.subr.mxu0 0.0
      %1410 = vmatpush1.msra.mxu0 %v43
      %1411 = vmatprep.subr.mxu0 0.0
      %1412 = vmatpush1.msra.mxu0 %v44
      %1413 = vmatprep.subr.mxu0 0.0
      %1414 = vmatpush1.msra.mxu0 %v45
      %1415 = vmatprep.subr.mxu0 0.0
      %1416 = vmatpush1.msra.mxu0 %v46
      %1417 = vmatprep.subr.mxu0 0.0
      %1418 = vmatpush1.msra.mxu0 %v47
      %1419 = vmatprep.subr.mxu0 0.0
      %1420 = vmatpush1.msra.mxu0 %v48
      %1421 = vmatprep.subr.mxu0 0.0
      %1422 = vmatpush1.msra.mxu0 %v49
      %1423 = vmatprep.subr.mxu0 0.0
      %1424 = vmatpush1.msra.mxu0 %v50
      %1425 = vmatprep.subr.mxu0 0.0
      %1426 = vmatpush1.msra.mxu0 %v51
      %1427 = vmatprep.subr.mxu0 0.0
      %1428 = vmatpush1.msra.mxu0 %v52
      %1429 = vmatprep.subr.mxu0 0.0
      %1430 = vmatpush1.msra.mxu0 %v53
      %1431 = vmatprep.subr.mxu0 0.0
      %1432 = vmatpush1.msra.mxu0 0.0
      %1433 = vmatprep.subr.mxu0 0.0
      %1434 = vmatpush1.msra.mxu0 0.0
      %1435 = vmatprep.subr.mxu0 0.0
      %1436 = vmatpush1.msra.mxu0 0.0
      %1437 = vmatprep.subr.mxu0 0.0
      %1438 = vmatpush1.msra.mxu0 0.0
      %1439 = vmatprep.subr.mxu0 0.0
      %1440 = vmatpush1.msra.mxu0 0.0
      %1441 = vmatprep.subr.mxu0 0.0
      %1442 = vmatpush1.msra.mxu0 0.0
      %1443 = vmatprep.subr.mxu0 0.0
      %1444 = vmatpush1.msra.mxu0 0.0
      %1445 = vmatprep.subr.mxu0 0.0
      %1446 = vmatpush1.msra.mxu0 0.0
      %1447 = vmatprep.subr.mxu0 0.0
      %1448 = vmatpush1.msra.mxu0 0.0
      %1449 = vmatprep.subr.mxu0 0.0
      %1450 = vmatpush1.msra.mxu0 0.0
      %1451 = vmatprep.subr.mxu0 0.0
      %1452 = vmatpush1.msra.mxu0 0.0
      %1453 = vmatprep.subr.mxu0 0.0
      %1454 = vmatpush1.msra.mxu0 0.0
      %1455 = vmatprep.subr.mxu0 0.0
      %1456 = vmatpush1.msra.mxu0 0.0
      %1457 = vmatprep.subr.mxu0 0.0
      %1458 = vmatpush1.msra.mxu0 0.0
      %1459 = vmatprep.subr.mxu0 0.0
      %1460 = vmatpush1.msra.mxu0 0.0
      %1461 = vmatprep.subr.mxu0 0.0
      %1462 = vmatpush1.msra.mxu0 0.0
      %1463 = vmatprep.mubr.f32.mxu0 0.0
      %1464 = vmatmul.mubr.f32.gmra.mrb[0].mxu0 %v1397
      %v1465 = vpop.f32.mrb[0].mxu0
      %v1466 = vadd.f32 %v1398, %v1465
      %v1467 = vpop.f32.mrb[0].mxu0
      %1468 = vdwg.mxu0
      %v1469 = vtanh.pop %v1466
      %1470 = vmatprep.subr.mxu0 0.0
      %1471 = vmatpush1.msra.mxu0 %v54
      %1472 = vmatprep.subr.mxu0 0.0
      %1473 = vmatpush1.msra.mxu0 %v55
      %1474 = vmatprep.subr.mxu0 0.0
      %1475 = vmatpush1.msra.mxu0 %v56
      %1476 = vmatprep.subr.mxu0 0.0
      %1477 = vmatpush1.msra.mxu0 %v57
      %1478 = vmatprep.subr.mxu0 0.0
      %1479 = vmatpush1.msra.mxu0 %v58
      %1480 = vmatprep.subr.mxu0 0.0
      %1481 = vmatpush1.msra.mxu0 %v59
      %1482 = vmatprep.subr.mxu0 0.0
      %1483 = vmatpush1.msra.mxu0 %v60
      %1484 = vmatprep.subr.mxu0 0.0
      %1485 = vmatpush1.msra.mxu0 %v61
      %1486 = vmatprep.subr.mxu0 0.0
      %1487 = vmatpush1.msra.mxu0 %v62
      %1488 = vmatprep.subr.mxu0 0.0
      %1489 = vmatpush1.msra.mxu0 %v63
      %1490 = vmatprep.subr.mxu0 0.0
      %1491 = vmatpush1.msra.mxu0 %v64
      %1492 = vmatprep.subr.mxu0 0.0
      %1493 = vmatpush1.msra.mxu0 %v65
      %1494 = vmatprep.subr.mxu0 0.0
      %1495 = vmatpush1.msra.mxu0 %v66
      %1496 = vmatprep.subr.mxu0 0.0
      %1497 = vmatpush1.msra.mxu0 %v67
      %1498 = vmatprep.subr.mxu0 0.0
      %1499 = vmatpush1.msra.mxu0 %v68
      %1500 = vmatprep.subr.mxu0 0.0
      %1501 = vmatpush1.msra.mxu0 %v69
      %1502 = vmatprep.subr.mxu0 0.0
      %1503 = vmatpush1.msra.mxu0 0.0
      %1504 = vmatprep.subr.mxu0 0.0
      %1505 = vmatpush1.msra.mxu0 0.0
      %1506 = vmatprep.subr.mxu0 0.0
      %1507 = vmatpush1.msra.mxu0 0.0
      %1508 = vmatprep.subr.mxu0 0.0
      %1509 = vmatpush1.msra.mxu0 0.0
      %1510 = vmatprep.subr.mxu0 0.0
      %1511 = vmatpush1.msra.mxu0 0.0
      %1512 = vmatprep.subr.mxu0 0.0
      %1513 = vmatpush1.msra.mxu0 0.0
      %1514 = vmatprep.subr.mxu0 0.0
      %1515 = vmatpush1.msra.mxu0 0.0
      %1516 = vmatprep.subr.mxu0 0.0
      %1517 = vmatpush1.msra.mxu0 0.0
      %1518 = vmatprep.subr.mxu0 0.0
      %1519 = vmatpush1.msra.mxu0 0.0
      %1520 = vmatprep.subr.mxu0 0.0
      %1521 = vmatpush1.msra.mxu0 0.0
      %1522 = vmatprep.subr.mxu0 0.0
      %1523 = vmatpush1.msra.mxu0 0.0
      %1524 = vmatprep.subr.mxu0 0.0
      %1525 = vmatpush1.msra.mxu0 0.0
      %1526 = vmatprep.subr.mxu0 0.0
      %1527 = vmatpush1.msra.mxu0 0.0
      %1528 = vmatprep.subr.mxu0 0.0
      %1529 = vmatpush1.msra.mxu0 0.0
      %1530 = vmatprep.subr.mxu0 0.0
      %1531 = vmatpush1.msra.mxu0 0.0
      %1532 = vmatprep.subr.mxu0 0.0
      %1533 = vmatpush1.msra.mxu0 0.0
      %1534 = vmatprep.mubr.f32.mxu0 0.0
      %1535 = vmatmul.mubr.f32.gmra.mrb[0].mxu0 %v1469
      %v1536 = vpop.f32.mrb[0].mxu0
      %v1537 = vadd.f32 %v82, %v1536
      %v1538 = vpop.f32.mrb[0].mxu0
      %1539 = vdwg.mxu0
      %v1540 = vmul.f32 %v1537, %v387
      %v1541 = vadd.f32 %v1253, %v1540
      %1542 = vst [vmem:[#allocation2] sm:$0xff] %v1541
      %s1543 = smul.u32 %s94, 8
      %s1544 = scalar_lea.vmem [#allocation7], %s1543
      %1545 = vst [vmem:[%s1544] sm:$0xff] %v1541
    $region26: #{_ode_forward_impl.1} parent=1 // loop_footer
      %s93 = sadd.s32 1, %s89
    $region27: #{_ode_forward_impl.1} parent=1 // loop_footer_branch
      %88 = sbr.rel target = $region23
    $region28: #{_ode_forward_impl.1} parent=1 // loop_exit
      _
    // Predicated region
    $region29: #{_ode_forward_impl.1} parent=1 // pred_check
      _
    $region30: #{_ode_forward_impl.1} parent=1 // pred_check_branch
      %1547 = sbr.rel (0) target = $region32
    $region31: #{_ode_forward_impl.1} parent=1 // pred_region
      %s1549 = ssub.s32 512, 512
      %1550 = vsyncadd [#allocation8], %s1549
      %s1551 = sshll.u32 [#allocation7], 4
      %s1552 = int_to_ptr.vmem [resolvable:$true] %s1551
      %1557 = dma.vmem_to_hbm [thread:$0]  %s1552, 512, %s8, [#allocation8], 128, 128, 8
    $region32: #{_ode_forward_impl.1} parent=1 // pred_fallthru
      _
    // Predicated region
    $region33: #{_ode_forward_impl.1} parent=1 // pred_check
      _
    $region34: #{_ode_forward_impl.1} parent=1 // pred_check_branch
      %1559 = sbr.rel (0) target = $region36
    $region35: #{_ode_forward_impl.1} parent=1 // pred_region
      %1560 = dma.done [#allocation8], 512
    $region36: #{_ode_forward_impl.1} parent=1 // pred_fallthru
      _
    %1561 = vsyncpa [#allocation8], 1

</llo_original>
